<compile_context>
chip_gen: v5e
topology: v5e:2x2
jax: 0.10.0
libtpu: 0.0.40
codegen_flags: <defaults>
</compile_context>

<pallas_src>
import functools
import math

import jax
import jax.numpy as jnp
import numpy as np
from jax import lax
from jax.experimental import pallas as pl
from jax.experimental.pallas import tpu as pltpu

_LANES = 128


def _res_block_kernel(x_ref, w1_ref, b1_ref, w2_ref, b2_ref, o_ref, *, seq_len):
    # x_ref : (Mt, Cp) f32   rows = (batch element, position) flattened, Mt = Bt*L
    # w*_ref: (3*Cp, Cp) bf16 fused tap-major weights [W[:,:,0].T; W[:,:,1].T; W[:,:,2].T]
    # b*_ref: (1, Cp) f32
    # o_ref : (Mt, Cp) f32
    mt, cp = x_ref.shape
    x = x_ref[...]

    # position-within-sequence of every row -> boundary masks for the +/-1 taps
    pos = lax.broadcasted_iota(jnp.int32, (mt, cp), 0) % seq_len
    not_first = (pos != 0).astype(jnp.float32)            # zero the wrapped left tap
    not_last = (pos != seq_len - 1).astype(jnp.float32)   # zero the wrapped right tap

    def conv3(h, w_ref, b_ref):
        # y[l] = h[l-1] @ W0 + h[l] @ W1 + h[l+1] @ W2 + b  (zeros outside [0, L))
        # taps aligned with pltpu.roll (XLU slot) + masks, packed along K for one dot.
        h_prev = (pltpu.roll(h, 1, axis=0) * not_first).astype(jnp.bfloat16)
        h_mid = h.astype(jnp.bfloat16)
        h_next = (pltpu.roll(h, mt - 1, axis=0) * not_last).astype(jnp.bfloat16)
        h_cat = jnp.concatenate([h_prev, h_mid, h_next], axis=1)   # (Mt, 3*Cp) bf16
        y = jnp.dot(h_cat, w_ref[...], preferred_element_type=jnp.float32)
        return y + b_ref[...]

    y1 = jnp.maximum(conv3(x, w1_ref, b1_ref), 0.0)
    y2 = conv3(y1, w2_ref, b2_ref)
    o_ref[...] = (x + y2).astype(o_ref.dtype)


def res_block_complex(x_ncl, w1, b1, w2, b2):
    """x_ncl: (B, C, L) f32; w*: (C, C, 3) PyTorch Conv1d weights; b*: (C,)."""
    B, C, L = x_ncl.shape
    Cp = -(-C // _LANES) * _LANES                      # lane-pad channels

    # channels-last rows, lane-pad channel dim.
    # TODO(synk): if the surrounding model keeps activations channels-last, these
    # transpose/pad HBM passes (and the inverse below) can be dropped entirely.
    x_rows = jnp.transpose(x_ncl, (0, 2, 1)).astype(jnp.float32).reshape(B * L, C)
    x_rows = jnp.pad(x_rows, ((0, 0), (0, Cp - C)))

    def prep_w(w):  # (C_out, C_in, 3) -> (3*Cp, Cp) bf16, taps stacked along K
        wt = jnp.transpose(w, (2, 1, 0)).astype(jnp.float32)        # (3, C_in, C_out)
        wt = jnp.pad(wt, ((0, 0), (0, Cp - C), (0, Cp - C)))
        return wt.reshape(3 * Cp, Cp).astype(jnp.bfloat16)

    def prep_b(b):
        return jnp.pad(b.astype(jnp.float32), (0, Cp - C)).reshape(1, Cp)

    w1p, w2p = prep_w(w1), prep_w(w2)
    b1p, b2p = prep_b(b1), prep_b(b2)

    # --- block sizing -------------------------------------------------------
    # ~2048 rows / <=1 MiB f32 activation block; in-kernel temporaries (~8x) plus
    # double-buffered in/out stay comfortably under 32 MiB on every generation.
    # Whole batch elements per block, Mt multiple of 8 sublanes, and at least
    # min(4, B) grid steps so both v7x TensorCores get work and the pipeline overlaps.
    target_rows = max(8, min(2048, (1 << 20) // (Cp * 4)))
    bt = max(1, min(B, max(1, target_rows // L)))
    min_steps = min(4, B)
    bt = min(bt, max(1, B // min_steps))
    align = 8 // math.gcd(L, 8)                        # Bt*L must be a multiple of 8
    bt = -(-bt // align) * align
    Bp = -(-B // bt) * bt
    if Bp != B:
        x_rows = jnp.pad(x_rows, ((0, (Bp - B) * L), (0, 0)))
    Mt = bt * L
    grid = (Bp // bt,)

    # derived scoped-VMEM budget, clamped so one binary is safe on v5e/v6e/v7x
    act_block = Mt * Cp * 4
    est = 14 * act_block + 2 * (3 * Cp * Cp * 2 + Cp * 4)
    vmem_limit = int(min(64 << 20, max(32 << 20, 2 * est)))

    kernel = functools.partial(_res_block_kernel, seq_len=L)

    def call(resident_mode):
        kw = {} if resident_mode is None else {"pipeline_mode": resident_mode}
        return pl.pallas_call(
            kernel,
            out_shape=jax.ShapeDtypeStruct((Bp * L, Cp), jnp.float32),
            grid=grid,
            in_specs=[
                pl.BlockSpec((Mt, Cp), lambda i: (i, 0)),            # activations
                pl.BlockSpec((3 * Cp, Cp), lambda i: (0, 0), **kw),  # w1 (resident)
                pl.BlockSpec((1, Cp), lambda i: (0, 0), **kw),       # b1 (resident)
                pl.BlockSpec((3 * Cp, Cp), lambda i: (0, 0), **kw),  # w2 (resident)
                pl.BlockSpec((1, Cp), lambda i: (0, 0), **kw),       # b2 (resident)
            ],
            out_specs=pl.BlockSpec((Mt, Cp), lambda i: (i, 0)),
            compiler_params=pltpu.CompilerParams(
                dimension_semantics=("parallel",),
                vmem_limit_bytes=vmem_limit,
            ),
        )(x_rows, w1p, b1p, w2p, b2p)

    try:
        out_rows = call(pl.Buffered(1))      # single-buffer the constant operands
    except Exception:                        # perf-only fallback: default buffering
        out_rows = call(None)

    out = out_rows[: B * L, :C].reshape(B, L, C)
    return jnp.transpose(out, (0, 2, 1))     # back to (B, C, L)


def ref_forward(x, w1, b1, w2, b2):
    """Pure-JAX reference matching PyTorch Conv1d semantics (NCL)."""
    dn = lax.conv_dimension_numbers(x.shape, w1.shape, ('NCH', 'OIH', 'NCH'))

    def conv(h, w, b):
        y = lax.conv_general_dilated(h, w, window_strides=(1,),
                                     padding=[(1, 1)], dimension_numbers=dn)
        return y + b[None, :, None]

    y1 = jnp.maximum(conv(x, w1, b1), 0.0)
    return x + conv(y1, w2, b2)


if __name__ == "__main__":
    B, C, L = 2, 8, 16        # in_planes = 8, sequence length = 16
    key = jax.random.PRNGKey(0)
    kx, kw1, kb1, kw2, kb2 = jax.random.split(key, 5)

    x = jax.random.normal(kx, (B, C, L), dtype=jnp.float32)
    # PyTorch-shaped Conv1d parameters: weight (C_out, C_in, 3), bias (C,)
    scale = 1.0 / np.sqrt(C * 3)
    w1 = jax.random.uniform(kw1, (C, C, 3), jnp.float32, -scale, scale)
    b1 = jax.random.uniform(kb1, (C,), jnp.float32, -scale, scale)
    w2 = jax.random.uniform(kw2, (C, C, 3), jnp.float32, -scale, scale)
    b2 = jax.random.uniform(kb2, (C,), jnp.float32, -scale, scale)

    out = jax.block_until_ready(res_block_complex(x, w1, b1, w2, b2))
    ref = jax.block_until_ready(ref_forward(x, w1, b1, w2, b2))

    assert out.shape == (B, C, L) and out.dtype == jnp.float32
    # bf16 MXU inputs (f32 accumulation) -> loosened tolerance vs. f32 reference
    assert np.allclose(np.asarray(out), np.asarray(ref), rtol=2e-2, atol=2e-2), \
        "Pallas kernel does not match reference Conv1d res-block"

    print("KERNEL_OK")
</pallas_src>

<mosaic_0001>
module attributes {stable_mosaic.version = 11 : i64} {
  func.func @_res_block_kernel(%arg0: i32, %arg1: memref<16x128xf32, #tpu.memory_space<vmem>>, %arg2: memref<384x128xbf16, #tpu.memory_space<vmem>>, %arg3: memref<1x128xf32, #tpu.memory_space<vmem>>, %arg4: memref<384x128xbf16, #tpu.memory_space<vmem>>, %arg5: memref<1x128xf32, #tpu.memory_space<vmem>>, %arg6: memref<16x128xf32, #tpu.memory_space<vmem>>) attributes {dimension_semantics = [#tpu.dimension_semantics<parallel>], iteration_bounds = array<i64: 2>, scalar_prefetch = 0 : i64, scratch_operands = 0 : i64, tpu.core_type = #tpu.core_type<tc>, window_params = [{transform_indices = @transform_0, window_bounds = array<i64: 16, 128>}, {pipeline_mode = #tpu.pipeline_mode<synchronous>, transform_indices = @transform_1, window_bounds = array<i64: 384, 128>}, {pipeline_mode = #tpu.pipeline_mode<synchronous>, transform_indices = @transform_2, window_bounds = array<i64: 1, 128>}, {pipeline_mode = #tpu.pipeline_mode<synchronous>, transform_indices = @transform_3, window_bounds = array<i64: 384, 128>}, {pipeline_mode = #tpu.pipeline_mode<synchronous>, transform_indices = @transform_4, window_bounds = array<i64: 1, 128>}, {transform_indices = @transform_5, window_bounds = array<i64: 16, 128>}]} {
    %c0 = arith.constant 0 : index
    %c0_0 = arith.constant 0 : index
    %0 = vector.load %arg1[%c0, %c0_0] : memref<16x128xf32, #tpu.memory_space<vmem>>, vector<16x128xf32>
    %1 = tpu.iota {dimensions = array<i32: 0>} : vector<16x128xi32>
    %c16_i32 = arith.constant 16 : i32
    %c0_i32 = arith.constant 0 : i32
    %2 = arith.cmpi eq, %c16_i32, %c0_i32 : i32
    %c1_i32 = arith.constant 1 : i32
    %3 = arith.select %2, %c1_i32, %c16_i32 : i32
    %4 = vector.broadcast %3 : i32 to vector<16x128xi32>
    %5 = arith.remsi %1, %4 : vector<16x128xi32>
    %c0_i32_1 = arith.constant 0 : i32
    %6 = vector.broadcast %c0_i32_1 : i32 to vector<16x128xi32>
    %7 = arith.cmpi ne, %5, %6 : vector<16x128xi32>
    %c0_i32_2 = arith.constant 0 : i32
    %8 = vector.broadcast %c0_i32_2 : i32 to vector<16x128xi32>
    %9 = arith.cmpi slt, %5, %8 : vector<16x128xi32>
    %c0_i32_3 = arith.constant 0 : i32
    %10 = arith.cmpi slt, %3, %c0_i32_3 : i32
    %11 = vector.broadcast %10 : i1 to vector<16x128xi1>
    %12 = vector.broadcast %11 : vector<16x128xi1> to vector<16x128xi1>
    %13 = arith.xori %9, %12 : vector<16x128xi1>
    %14 = arith.andi %13, %7 : vector<16x128xi1>
    %15 = vector.broadcast %3 : i32 to vector<16x128xi32>
    %16 = arith.addi %5, %15 : vector<16x128xi32>
    %17 = arith.select %14, %16, %5 : vector<16x128xi1>, vector<16x128xi32>
    %c0_i32_4 = arith.constant 0 : i32
    %18 = vector.broadcast %c0_i32_4 : i32 to vector<16x128xi32>
    %19 = arith.cmpi ne, %17, %18 : vector<16x128xi32>
    %20 = arith.extui %19 : vector<16x128xi1> to vector<16x128xi32>
    %21 = arith.sitofp %20 : vector<16x128xi32> to vector<16x128xf32>
    %c15_i32 = arith.constant 15 : i32
    %22 = vector.broadcast %c15_i32 : i32 to vector<16x128xi32>
    %23 = arith.cmpi ne, %17, %22 : vector<16x128xi32>
    %24 = arith.extui %23 : vector<16x128xi1> to vector<16x128xi32>
    %25 = arith.sitofp %24 : vector<16x128xi32> to vector<16x128xf32>
    %c1_i32_5 = arith.constant 1 : i32
    %26 = tpu.dynamic_rotate %0 by %c1_i32_5 dim 0 : vector<16x128xf32>, i32 -> vector<16x128xf32>
    %27 = arith.mulf %26, %21 : vector<16x128xf32>
    %28 = arith.truncf %27 : vector<16x128xf32> to vector<16x128xbf16>
    %29 = arith.truncf %0 : vector<16x128xf32> to vector<16x128xbf16>
    %c15_i32_6 = arith.constant 15 : i32
    %30 = tpu.dynamic_rotate %0 by %c15_i32_6 dim 0 : vector<16x128xf32>, i32 -> vector<16x128xf32>
    %31 = arith.mulf %30, %25 : vector<16x128xf32>
    %32 = arith.truncf %31 : vector<16x128xf32> to vector<16x128xbf16>
    %33 = tpu.concatenate %28, %29, %32 in 1 : vector<16x128xbf16>, vector<16x128xbf16>, vector<16x128xbf16> -> vector<16x384xbf16>
    %c0_7 = arith.constant 0 : index
    %c0_8 = arith.constant 0 : index
    %34 = vector.load %arg2[%c0_7, %c0_8] : memref<384x128xbf16, #tpu.memory_space<vmem>>, vector<384x128xbf16>
    %cst = arith.constant dense<0.000000e+00> : vector<16x128xf32>
    %35 = tpu.matmul %33, %34, %cst {dimension_numbers = #tpu.dot_dimension_numbers<[1], [0], [0], [1], [0, 0, 1, 1], [], []>} : vector<16x384xbf16>, vector<384x128xbf16>, vector<16x128xf32> -> vector<16x128xf32>
    %c0_9 = arith.constant 0 : index
    %c0_10 = arith.constant 0 : index
    %36 = vector.load %arg3[%c0_9, %c0_10] : memref<1x128xf32, #tpu.memory_space<vmem>>, vector<1x128xf32>
    %37 = vector.broadcast %36 : vector<1x128xf32> to vector<16x128xf32>
    %38 = arith.addf %35, %37 : vector<16x128xf32>
    %cst_11 = arith.constant 0.000000e+00 : f32
    %39 = vector.broadcast %cst_11 : f32 to vector<16x128xf32>
    %40 = arith.maximumf %38, %39 : vector<16x128xf32>
    %c1_i32_12 = arith.constant 1 : i32
    %41 = tpu.dynamic_rotate %40 by %c1_i32_12 dim 0 : vector<16x128xf32>, i32 -> vector<16x128xf32>
    %42 = arith.mulf %41, %21 : vector<16x128xf32>
    %43 = arith.truncf %42 : vector<16x128xf32> to vector<16x128xbf16>
    %44 = arith.truncf %40 : vector<16x128xf32> to vector<16x128xbf16>
    %c15_i32_13 = arith.constant 15 : i32
    %45 = tpu.dynamic_rotate %40 by %c15_i32_13 dim 0 : vector<16x128xf32>, i32 -> vector<16x128xf32>
    %46 = arith.mulf %45, %25 : vector<16x128xf32>
    %47 = arith.truncf %46 : vector<16x128xf32> to vector<16x128xbf16>
    %48 = tpu.concatenate %43, %44, %47 in 1 : vector<16x128xbf16>, vector<16x128xbf16>, vector<16x128xbf16> -> vector<16x384xbf16>
    %c0_14 = arith.constant 0 : index
    %c0_15 = arith.constant 0 : index
    %49 = vector.load %arg4[%c0_14, %c0_15] : memref<384x128xbf16, #tpu.memory_space<vmem>>, vector<384x128xbf16>
    %cst_16 = arith.constant dense<0.000000e+00> : vector<16x128xf32>
    %50 = tpu.matmul %48, %49, %cst_16 {dimension_numbers = #tpu.dot_dimension_numbers<[1], [0], [0], [1], [0, 0, 1, 1], [], []>} : vector<16x384xbf16>, vector<384x128xbf16>, vector<16x128xf32> -> vector<16x128xf32>
    %c0_17 = arith.constant 0 : index
    %c0_18 = arith.constant 0 : index
    %51 = vector.load %arg5[%c0_17, %c0_18] : memref<1x128xf32, #tpu.memory_space<vmem>>, vector<1x128xf32>
    %52 = vector.broadcast %51 : vector<1x128xf32> to vector<16x128xf32>
    %53 = arith.addf %50, %52 : vector<16x128xf32>
    %54 = arith.addf %0, %53 : vector<16x128xf32>
    %c0_19 = arith.constant 0 : index
    %c0_20 = arith.constant 0 : index
    %55 = vector.load %arg6[%c0_19, %c0_20] : memref<16x128xf32, #tpu.memory_space<vmem>>, vector<16x128xf32>
    tpu.vector_store %arg6[%c0_19, %c0_20], %54 {strides = array<i32>} : memref<16x128xf32, #tpu.memory_space<vmem>>, vector<16x128xf32>,
    return
  }
  func.func @transform_0(%arg0: i32) -> (i32, i32) {
    %c0_i32 = arith.constant 0 : i32
    %c0_i32_0 = arith.constant 0 : i32
    return %arg0, %c0_i32 : i32, i32
  }
  func.func @transform_1(%arg0: i32) -> (i32, i32) {
    %c0_i32 = arith.constant 0 : i32
    %c0_i32_0 = arith.constant 0 : i32
    %c0_i32_1 = arith.constant 0 : i32
    return %c0_i32, %c0_i32_0 : i32, i32
  }
  func.func @transform_2(%arg0: i32) -> (i32, i32) {
    %c0_i32 = arith.constant 0 : i32
    %c0_i32_0 = arith.constant 0 : i32
    %c0_i32_1 = arith.constant 0 : i32
    return %c0_i32, %c0_i32_0 : i32, i32
  }
  func.func @transform_3(%arg0: i32) -> (i32, i32) {
    %c0_i32 = arith.constant 0 : i32
    %c0_i32_0 = arith.constant 0 : i32
    %c0_i32_1 = arith.constant 0 : i32
    return %c0_i32, %c0_i32_0 : i32, i32
  }
  func.func @transform_4(%arg0: i32) -> (i32, i32) {
    %c0_i32 = arith.constant 0 : i32
    %c0_i32_0 = arith.constant 0 : i32
    %c0_i32_1 = arith.constant 0 : i32
    return %c0_i32, %c0_i32_0 : i32, i32
  }
  func.func @transform_5(%arg0: i32) -> (i32, i32) {
    %c0_i32 = arith.constant 0 : i32
    %c0_i32_0 = arith.constant 0 : i32
    return %arg0, %c0_i32 : i32, i32
  }
}

module attributes {stable_mosaic.version = 11 : i64} {
  func.func @_res_block_kernel(%arg0: i32, %arg1: memref<16x128xf32, #tpu.memory_space<vmem>>, %arg2: memref<384x128xbf16, #tpu.memory_space<vmem>>, %arg3: memref<1x128xf32, #tpu.memory_space<vmem>>, %arg4: memref<384x128xbf16, #tpu.memory_space<vmem>>, %arg5: memref<1x128xf32, #tpu.memory_space<vmem>>, %arg6: memref<16x128xf32, #tpu.memory_space<vmem>>) attributes {dimension_semantics = [#tpu.dimension_semantics<parallel>], iteration_bounds = array<i64: 2>, scalar_prefetch = 0 : i64, scratch_operands = 0 : i64, tpu.core_type = #tpu.core_type<tc>, window_params = [{transform_indices = @transform_0, window_bounds = array<i64: 16, 128>}, {pipeline_mode = #tpu.pipeline_mode<synchronous>, transform_indices = @transform_1, window_bounds = array<i64: 384, 128>}, {pipeline_mode = #tpu.pipeline_mode<synchronous>, transform_indices = @transform_2, window_bounds = array<i64: 1, 128>}, {pipeline_mode = #tpu.pipeline_mode<synchronous>, transform_indices = @transform_3, window_bounds = array<i64: 384, 128>}, {pipeline_mode = #tpu.pipeline_mode<synchronous>, transform_indices = @transform_4, window_bounds = array<i64: 1, 128>}, {transform_indices = @transform_5, window_bounds = array<i64: 16, 128>}]} {
    %c0 = arith.constant 0 : index
    %c0_0 = arith.constant 0 : index
    %0 = vector.load %arg1[%c0, %c0_0] : memref<16x128xf32, #tpu.memory_space<vmem>>, vector<16x128xf32>
    %1 = tpu.iota {dimensions = array<i32: 0>} : vector<16x128xi32>
    %c16_i32 = arith.constant 16 : i32
    %c0_i32 = arith.constant 0 : i32
    %2 = arith.cmpi eq, %c16_i32, %c0_i32 : i32
    %c1_i32 = arith.constant 1 : i32
    %3 = arith.select %2, %c1_i32, %c16_i32 : i32
    %4 = vector.broadcast %3 : i32 to vector<16x128xi32>
    %5 = arith.remsi %1, %4 : vector<16x128xi32>
    %c0_i32_1 = arith.constant 0 : i32
    %6 = vector.broadcast %c0_i32_1 : i32 to vector<16x128xi32>
    %7 = arith.cmpi ne, %5, %6 : vector<16x128xi32>
    %c0_i32_2 = arith.constant 0 : i32
    %8 = vector.broadcast %c0_i32_2 : i32 to vector<16x128xi32>
    %9 = arith.cmpi slt, %5, %8 : vector<16x128xi32>
    %c0_i32_3 = arith.constant 0 : i32
    %10 = arith.cmpi slt, %3, %c0_i32_3 : i32
    %11 = vector.broadcast %10 : i1 to vector<16x128xi1>
    %12 = vector.broadcast %11 : vector<16x128xi1> to vector<16x128xi1>
    %13 = arith.xori %9, %12 : vector<16x128xi1>
    %14 = arith.andi %13, %7 : vector<16x128xi1>
    %15 = vector.broadcast %3 : i32 to vector<16x128xi32>
    %16 = arith.addi %5, %15 : vector<16x128xi32>
    %17 = arith.select %14, %16, %5 : vector<16x128xi1>, vector<16x128xi32>
    %c0_i32_4 = arith.constant 0 : i32
    %18 = vector.broadcast %c0_i32_4 : i32 to vector<16x128xi32>
    %19 = arith.cmpi ne, %17, %18 : vector<16x128xi32>
    %20 = arith.extui %19 : vector<16x128xi1> to vector<16x128xi32>
    %21 = arith.sitofp %20 : vector<16x128xi32> to vector<16x128xf32>
    %c15_i32 = arith.constant 15 : i32
    %22 = vector.broadcast %c15_i32 : i32 to vector<16x128xi32>
    %23 = arith.cmpi ne, %17, %22 : vector<16x128xi32>
    %24 = arith.extui %23 : vector<16x128xi1> to vector<16x128xi32>
    %25 = arith.sitofp %24 : vector<16x128xi32> to vector<16x128xf32>
    %c1_i32_5 = arith.constant 1 : i32
    %26 = tpu.dynamic_rotate %0 by %c1_i32_5 dim 0 : vector<16x128xf32>, i32 -> vector<16x128xf32>
    %27 = arith.mulf %26, %21 : vector<16x128xf32>
    %28 = arith.truncf %27 : vector<16x128xf32> to vector<16x128xbf16>
    %29 = arith.truncf %0 : vector<16x128xf32> to vector<16x128xbf16>
    %c15_i32_6 = arith.constant 15 : i32
    %30 = tpu.dynamic_rotate %0 by %c15_i32_6 dim 0 : vector<16x128xf32>, i32 -> vector<16x128xf32>
    %31 = arith.mulf %30, %25 : vector<16x128xf32>
    %32 = arith.truncf %31 : vector<16x128xf32> to vector<16x128xbf16>
    %33 = tpu.concatenate %28, %29, %32 in 1 : vector<16x128xbf16>, vector<16x128xbf16>, vector<16x128xbf16> -> vector<16x384xbf16>
    %c0_7 = arith.constant 0 : index
    %c0_8 = arith.constant 0 : index
    %34 = vector.load %arg2[%c0_7, %c0_8] : memref<384x128xbf16, #tpu.memory_space<vmem>>, vector<384x128xbf16>
    %cst = arith.constant dense<0.000000e+00> : vector<16x128xf32>
    %35 = tpu.matmul %33, %34, %cst {dimension_numbers = #tpu.dot_dimension_numbers<[1], [0], [0], [1], [0, 0, 1, 1], [], []>} : vector<16x384xbf16>, vector<384x128xbf16>, vector<16x128xf32> -> vector<16x128xf32>
    %c0_9 = arith.constant 0 : index
    %c0_10 = arith.constant 0 : index
    %36 = vector.load %arg3[%c0_9, %c0_10] : memref<1x128xf32, #tpu.memory_space<vmem>>, vector<1x128xf32>
    %37 = vector.broadcast %36 : vector<1x128xf32> to vector<16x128xf32>
    %38 = arith.addf %35, %37 : vector<16x128xf32>
    %cst_11 = arith.constant 0.000000e+00 : f32
    %39 = vector.broadcast %cst_11 : f32 to vector<16x128xf32>
    %40 = arith.maximumf %38, %39 : vector<16x128xf32>
    %c1_i32_12 = arith.constant 1 : i32
    %41 = tpu.dynamic_rotate %40 by %c1_i32_12 dim 0 : vector<16x128xf32>, i32 -> vector<16x128xf32>
    %42 = arith.mulf %41, %21 : vector<16x128xf32>
    %43 = arith.truncf %42 : vector<16x128xf32> to vector<16x128xbf16>
    %44 = arith.truncf %40 : vector<16x128xf32> to vector<16x128xbf16>
    %c15_i32_13 = arith.constant 15 : i32
    %45 = tpu.dynamic_rotate %40 by %c15_i32_13 dim 0 : vector<16x128xf32>, i32 -> vector<16x128xf32>
    %46 = arith.mulf %45, %25 : vector<16x128xf32>
    %47 = arith.truncf %46 : vector<16x128xf32> to vector<16x128xbf16>
    %48 = tpu.concatenate %43, %44, %47 in 1 : vector<16x128xbf16>, vector<16x128xbf16>, vector<16x128xbf16> -> vector<16x384xbf16>
    %c0_14 = arith.constant 0 : index
    %c0_15 = arith.constant 0 : index
    %49 = vector.load %arg4[%c0_14, %c0_15] : memref<384x128xbf16, #tpu.memory_space<vmem>>, vector<384x128xbf16>
    %cst_16 = arith.constant dense<0.000000e+00> : vector<16x128xf32>
    %50 = tpu.matmul %48, %49, %cst_16 {dimension_numbers = #tpu.dot_dimension_numbers<[1], [0], [0], [1], [0, 0, 1, 1], [], []>} : vector<16x384xbf16>, vector<384x128xbf16>, vector<16x128xf32> -> vector<16x128xf32>
    %c0_17 = arith.constant 0 : index
    %c0_18 = arith.constant 0 : index
    %51 = vector.load %arg5[%c0_17, %c0_18] : memref<1x128xf32, #tpu.memory_space<vmem>>, vector<1x128xf32>
    %52 = vector.broadcast %51 : vector<1x128xf32> to vector<16x128xf32>
    %53 = arith.addf %50, %52 : vector<16x128xf32>
    %54 = arith.addf %0, %53 : vector<16x128xf32>
    %c0_19 = arith.constant 0 : index
    %c0_20 = arith.constant 0 : index
    %55 = vector.load %arg6[%c0_19, %c0_20] : memref<16x128xf32, #tpu.memory_space<vmem>>, vector<16x128xf32>
    tpu.vector_store %arg6[%c0_19, %c0_20], %54 {strides = array<i32>} : memref<16x128xf32, #tpu.memory_space<vmem>>, vector<16x128xf32>,
    return
  }
  func.func @transform_0(%arg0: i32) -> (i32, i32) {
    %c0_i32 = arith.constant 0 : i32
    %c0_i32_0 = arith.constant 0 : i32
    return %arg0, %c0_i32 : i32, i32
  }
  func.func @transform_1(%arg0: i32) -> (i32, i32) {
    %c0_i32 = arith.constant 0 : i32
    %c0_i32_0 = arith.constant 0 : i32
    %c0_i32_1 = arith.constant 0 : i32
    return %c0_i32, %c0_i32_0 : i32, i32
  }
  func.func @transform_2(%arg0: i32) -> (i32, i32) {
    %c0_i32 = arith.constant 0 : i32
    %c0_i32_0 = arith.constant 0 : i32
    %c0_i32_1 = arith.constant 0 : i32
    return %c0_i32, %c0_i32_0 : i32, i32
  }
  func.func @transform_3(%arg0: i32) -> (i32, i32) {
    %c0_i32 = arith.constant 0 : i32
    %c0_i32_0 = arith.constant 0 : i32
    %c0_i32_1 = arith.constant 0 : i32
    return %c0_i32, %c0_i32_0 : i32, i32
  }
  func.func @transform_4(%arg0: i32) -> (i32, i32) {
    %c0_i32 = arith.constant 0 : i32
    %c0_i32_0 = arith.constant 0 : i32
    %c0_i32_1 = arith.constant 0 : i32
    return %c0_i32, %c0_i32_0 : i32, i32
  }
  func.func @transform_5(%arg0: i32) -> (i32, i32) {
    %c0_i32 = arith.constant 0 : i32
    %c0_i32_0 = arith.constant 0 : i32
    return %arg0, %c0_i32 : i32, i32
  }
}

</mosaic_0001>

<llo_original>
// kernel: tpu_custom_call.1
$region0: #{tpu_custom_call.1}
  #allocation0 [shape = 'u32[]', space=smem, size = 0x4, offset = 0x4, fixed_abs, tag = 'smem constant byte address 0x4 - core index']
  #allocation1 [shape = 'u32[72,128]{1,0:T(1,128)}', space=vmem, size = 0x9000, scoped, tag = 'internal scratch']
  %s0 = inlined_call_operand.hbm [shape: f32[32,128], index: 0, kind: input, shape index: {}]
  %s1 = inlined_call_operand.hbm [shape: bf16[384,128], index: 1, kind: input, shape index: {}]
  %s2 = inlined_call_operand.vmem [shape: f32[1,128], index: 2, kind: input, shape index: {}]
  %s3 = inlined_call_operand.hbm [shape: bf16[384,128], index: 3, kind: input, shape index: {}]
  %s4 = inlined_call_operand.vmem [shape: f32[1,128], index: 4, kind: input, shape index: {}]
  %s5 = inlined_call_operand.hbm [shape: f32[32,128], index: 5, kind: output, shape index: {}]
  %s6 = sld [smem:[#allocation0]]
  $region65: #{tpu_custom_call.1} parent=0
    _
  %s8 = ssub.s32 1, %s6
  %s9 = scalar_select 0, %s8, %s6
  $region1: #{tpu_custom_call.1} parent=0
    #allocation2 [shape = 'u8[16384]{0}', space=vmem, size = 0x4000, scoped, tag = 'input window, operand 0']
    #allocation3 [shape = 's32[2]{0}', space=sflag, size = 0x8, scoped, tag = 'scoped memory for tpu_custom_call.1']
    #allocation4 [shape = 's32[2]{0}', space=sflag, size = 0x8, scoped, tag = 'scoped memory for tpu_custom_call.1']
    #allocation5 [shape = 'u8[98304]{0}', space=vmem, size = 0x18000, scoped, tag = 'input window, operand 1, single buffered']
    #allocation6 [shape = 's32[1]{0}', space=sflag, size = 0x4, scoped, tag = 'scoped memory for tpu_custom_call.1']
    #allocation7 [shape = 'u8[98304]{0}', space=vmem, size = 0x18000, scoped, tag = 'input window, operand 3, single buffered']
    #allocation8 [shape = 'u8[16384]{0}', space=vmem, size = 0x4000, scoped, tag = 'output window, operand 0']
    %10 = vsyncpa [#allocation3], 0
    %s11 = scalar_lea.sflag [#allocation3], 1
    %12 = vsyncpa %s11, 0
    %13 = vsyncpa [#allocation6], 0
    %14 = vsyncpa [#allocation4], 0
    %s15 = scalar_lea.sflag [#allocation4], 1
    %16 = vsyncpa %s15, 0
    loop: start=0, step=1, limit=4
    $region2: #{tpu_custom_call.1} parent=1 // loop_pre_header
      _
    $region3: #{tpu_custom_call.1} parent=1 // loop_header
      %s18 = sphi 0, %s22
      %p19 = scmp.ge.s32.totalorder %s18, 4
      %s28 = sphi 0, %s30
      %s31 = sphi 0, %s28
      %s32 = sphi 0, %s31
      %s48 = sphi 0, %s32
      %s52 = sphi 0, %s52
      %s54 = sphi 0, %s52
      %s55 = sphi 0, %s54
      %s69 = sphi 0, %s55
      %s73 = sphi 0, %s73
      %s75 = sphi 0, %s73
      %s76 = sphi 0, %s75
      %s90 = sphi 0, %s76
      %s94 = sphi 0, %s94
      %s96 = sphi 0, %s94
      %s97 = sphi 0, %s96
      %s111 = sphi 0, %s97
      %s115 = sphi 0, %s115
      %s117 = sphi 0, %s115
      %s118 = sphi 0, %s117
      %s132 = sphi 0, %s118
      %s138 = sphi 0, %s140
      %s141 = sphi 0, %s138
      %s142 = sphi 0, %s141
      %s158 = sphi 0, %s142
    $region4: #{tpu_custom_call.1} parent=1 // loop_header_branch
      %21 = sbr.rel (%p19) target = $region8
    $region5: #{tpu_custom_call.1} parent=1 // loop_body
      %s23 = ssub.s32 %s18, 1
      %s24 = ssub.s32 %s18, 2
      %s25 = sadd.s32 %s18, 1
      %s26 = ssub.s32 %s18, %s25
      %p27 = scmp.eq.s32.totalorder %s26, 0
      %s29 = sadd.s32 %s28, 1
      %s30 = scalar_select %p27, %s28, %s29
      %p33 = pneg %p27
      %p34 = scmp.eq.s32.totalorder %s18, 1
      %p35 = por %p33, %p34
      %p36 = scmp.ne.s32.totalorder %s28, %s31
      %p37 = scmp.eq.s32.totalorder %s18, 0
      %p38 = por %p36, %p37
      %p39 = scmp.ne.s32.totalorder %s28, %s31
      %p40 = scmp.eq.s32.totalorder %s23, 1
      %p41 = por %p39, %p40
      %p42 = scmp.ne.s32.totalorder %s31, %s32
      %p43 = scmp.eq.s32.totalorder %s23, 0
      %p44 = por %p42, %p43
      %p45 = scmp.ne.s32.totalorder %s31, %s32
      %p46 = scmp.eq.s32.totalorder %s24, 1
      %p47 = por %p45, %p46
      %p49 = scmp.ne.s32.totalorder %s32, %s48
      %p50 = scmp.eq.s32.totalorder %s24, 0
      %p51 = por %p49, %p50
      %s53 = sadd.s32 %s52, 1
      %p56 = scmp.eq.s32.totalorder %s18, 1
      %p57 = scmp.ne.s32.totalorder %s52, %s54
      %p58 = scmp.eq.s32.totalorder %s18, 0
      %p59 = por %p57, %p58
      %p60 = scmp.ne.s32.totalorder %s52, %s54
      %p61 = scmp.eq.s32.totalorder %s23, 1
      %p62 = por %p60, %p61
      %p63 = scmp.ne.s32.totalorder %s54, %s55
      %p64 = scmp.eq.s32.totalorder %s23, 0
      %p65 = por %p63, %p64
      %p66 = scmp.ne.s32.totalorder %s54, %s55
      %p67 = scmp.eq.s32.totalorder %s24, 1
      %p68 = por %p66, %p67
      %p70 = scmp.ne.s32.totalorder %s55, %s69
      %p71 = scmp.eq.s32.totalorder %s24, 0
      %p72 = por %p70, %p71
      %s74 = sadd.s32 %s73, 1
      %p77 = scmp.eq.s32.totalorder %s18, 1
      %p78 = scmp.ne.s32.totalorder %s73, %s75
      %p79 = scmp.eq.s32.totalorder %s18, 0
      %p80 = por %p78, %p79
      %p81 = scmp.ne.s32.totalorder %s73, %s75
      %p82 = scmp.eq.s32.totalorder %s23, 1
      %p83 = por %p81, %p82
      %p84 = scmp.ne.s32.totalorder %s75, %s76
      %p85 = scmp.eq.s32.totalorder %s23, 0
      %p86 = por %p84, %p85
      %p87 = scmp.ne.s32.totalorder %s75, %s76
      %p88 = scmp.eq.s32.totalorder %s24, 1
      %p89 = por %p87, %p88
      %p91 = scmp.ne.s32.totalorder %s76, %s90
      %p92 = scmp.eq.s32.totalorder %s24, 0
      %p93 = por %p91, %p92
      %s95 = sadd.s32 %s94, 1
      %p98 = scmp.eq.s32.totalorder %s18, 1
      %p99 = scmp.ne.s32.totalorder %s94, %s96
      %p100 = scmp.eq.s32.totalorder %s18, 0
      %p101 = por %p99, %p100
      %p102 = scmp.ne.s32.totalorder %s94, %s96
      %p103 = scmp.eq.s32.totalorder %s23, 1
      %p104 = por %p102, %p103
      %p105 = scmp.ne.s32.totalorder %s96, %s97
      %p106 = scmp.eq.s32.totalorder %s23, 0
      %p107 = por %p105, %p106
      %p108 = scmp.ne.s32.totalorder %s96, %s97
      %p109 = scmp.eq.s32.totalorder %s24, 1
      %p110 = por %p108, %p109
      %p112 = scmp.ne.s32.totalorder %s97, %s111
      %p113 = scmp.eq.s32.totalorder %s24, 0
      %p114 = por %p112, %p113
      %s116 = sadd.s32 %s115, 1
      %p119 = scmp.eq.s32.totalorder %s18, 1
      %p120 = scmp.ne.s32.totalorder %s115, %s117
      %p121 = scmp.eq.s32.totalorder %s18, 0
      %p122 = por %p120, %p121
      %p123 = scmp.ne.s32.totalorder %s115, %s117
      %p124 = scmp.eq.s32.totalorder %s23, 1
      %p125 = por %p123, %p124
      %p126 = scmp.ne.s32.totalorder %s117, %s118
      %p127 = scmp.eq.s32.totalorder %s23, 0
      %p128 = por %p126, %p127
      %p129 = scmp.ne.s32.totalorder %s117, %s118
      %p130 = scmp.eq.s32.totalorder %s24, 1
      %p131 = por %p129, %p130
      %p133 = scmp.ne.s32.totalorder %s118, %s132
      %p134 = scmp.eq.s32.totalorder %s24, 0
      %p135 = por %p133, %p134
      %s136 = ssub.s32 %s18, %s25
      %p137 = scmp.eq.s32.totalorder %s136, 0
      %s139 = sadd.s32 %s138, 1
      %s140 = scalar_select %p137, %s138, %s139
      %p143 = pneg %p137
      %p144 = scmp.eq.s32.totalorder %s18, 1
      %p145 = por %p143, %p144
      %p146 = scmp.ne.s32.totalorder %s138, %s141
      %p147 = scmp.eq.s32.totalorder %s18, 0
      %p148 = por %p146, %p147
      %p149 = scmp.ne.s32.totalorder %s138, %s141
      %p150 = scmp.eq.s32.totalorder %s23, 1
      %p151 = por %p149, %p150
      %p152 = scmp.ne.s32.totalorder %s141, %s142
      %p153 = scmp.eq.s32.totalorder %s23, 0
      %p154 = por %p152, %p153
      %p155 = scmp.ne.s32.totalorder %s141, %s142
      %p156 = scmp.eq.s32.totalorder %s24, 1
      %p157 = por %p155, %p156
      %p159 = scmp.ne.s32.totalorder %s142, %s158
      %p160 = scmp.eq.s32.totalorder %s24, 0
      %p161 = por %p159, %p160
      %p162 = scmp.le.s32.totalorder 1, %s18
      %p163 = scmp.lt.s32.totalorder %s18, 3
      %p164 = pnand %p162, %p163
      %p165 = pneg %p164
      // Predicated region
      $region9: #{tpu_custom_call.1} parent=5 // pred_check
        _
      $region10: #{tpu_custom_call.1} parent=5 // pred_check_branch
        %167 = sbr.rel (%p164) target = $region12
      $region11: #{tpu_custom_call.1} parent=5 // pred_region
        %s168 = ssub.s32 %s18, 1
        // Predicated region
        $region13: #{tpu_custom_call.1} parent=11 // pred_check
          %p169 = pneg %p65
        $region14: #{tpu_custom_call.1} parent=11 // pred_check_branch
          %171 = sbr.rel (%p169) target = $region16
        $region15: #{tpu_custom_call.1} parent=11 // pred_region
          %173 = vsyncadd [#allocation6], 0
          %s174 = sshll.u32 %s1, 4
          %s175 = int_to_ptr.hbm [resolvable:$true] %s174
          %s176 = sshll.u32 [#allocation5], 4
          %s177 = int_to_ptr.vmem [resolvable:$true] %s176
          %182 = dma.hbm_to_vmem [thread:$0]  %s175, 3072, %s177, [#allocation6], 64, 64, 4
        $region16: #{tpu_custom_call.1} parent=11 // pred_fallthru
          _
        // Predicated region
        $region17: #{tpu_custom_call.1} parent=11 // pred_check
          %p183 = pneg %p86
        $region18: #{tpu_custom_call.1} parent=11 // pred_check_branch
          %185 = sbr.rel (%p183) target = $region20
        $region19: #{tpu_custom_call.1} parent=11 // pred_region
          _
        $region20: #{tpu_custom_call.1} parent=11 // pred_fallthru
          _
        // Predicated region
        $region21: #{tpu_custom_call.1} parent=11 // pred_check
          %p186 = pneg %p107
        $region22: #{tpu_custom_call.1} parent=11 // pred_check_branch
          %188 = sbr.rel (%p186) target = $region24
        $region23: #{tpu_custom_call.1} parent=11 // pred_region
          %190 = vsyncadd [#allocation6], 0
          %s191 = sshll.u32 %s3, 4
          %s192 = int_to_ptr.hbm [resolvable:$true] %s191
          %s193 = sshll.u32 [#allocation7], 4
          %s194 = int_to_ptr.vmem [resolvable:$true] %s193
          %199 = dma.hbm_to_vmem [thread:$0]  %s192, 3072, %s194, [#allocation6], 64, 64, 4
        $region24: #{tpu_custom_call.1} parent=11 // pred_fallthru
          _
        // Predicated region
        $region25: #{tpu_custom_call.1} parent=11 // pred_check
          %p200 = pneg %p128
        $region26: #{tpu_custom_call.1} parent=11 // pred_check_branch
          %202 = sbr.rel (%p200) target = $region28
        $region27: #{tpu_custom_call.1} parent=11 // pred_region
          _
        $region28: #{tpu_custom_call.1} parent=11 // pred_fallthru
          _
      $region12: #{tpu_custom_call.1} parent=5 // pred_fallthru
        _
      %p203 = scmp.lt.s32.totalorder %s18, 2
      // Predicated region
      $region29: #{tpu_custom_call.1} parent=5 // pred_check
        %p204 = pneg %p203
      $region30: #{tpu_custom_call.1} parent=5 // pred_check_branch
        %206 = sbr.rel (%p204) target = $region32
      $region31: #{tpu_custom_call.1} parent=5 // pred_region
        // Predicated region
        $region33: #{tpu_custom_call.1} parent=31 // pred_check
          %p207 = pneg %p38
        $region34: #{tpu_custom_call.1} parent=31 // pred_check_branch
          %209 = sbr.rel (%p207) target = $region36
        $region35: #{tpu_custom_call.1} parent=31 // pred_region
          %s210 = sand.u32 %s28, 1
          %s211 = scalar_lea.sflag [#allocation3], %s210
          %s212 = sand.u32 %s28, 1
          %s213 = smul.addr %s212, 16
          %s214 = scalar_lea.vmem [#allocation2], %s213
          %s215 = smul.u32 2, %s18
          %217 = vsyncadd %s211, 0
          %s218 = smul.addr %s215, 8
          %s219 = scalar_lea.hbm %s0, %s218
          %s220 = sshll.u32 %s219, 4
          %s221 = int_to_ptr.hbm [resolvable:$true] %s220
          %s222 = sshll.u32 %s214, 4
          %s223 = int_to_ptr.vmem [resolvable:$true] %s222
          %228 = dma.hbm_to_vmem [thread:$0]  %s221, 256, %s223, %s211, 128, 128, 8
        $region36: #{tpu_custom_call.1} parent=31 // pred_fallthru
          _
      $region32: #{tpu_custom_call.1} parent=5 // pred_fallthru
        _
      %p229 = scmp.le.s32.totalorder 1, %s18
      %p230 = scmp.lt.s32.totalorder %s18, 3
      %p231 = pnand %p229, %p230
      %p232 = pneg %p231
      // Predicated region
      $region37: #{tpu_custom_call.1} parent=5 // pred_check
        _
      $region38: #{tpu_custom_call.1} parent=5 // pred_check_branch
        %234 = sbr.rel (%p231) target = $region40
      $region39: #{tpu_custom_call.1} parent=5 // pred_region
        %s235 = ssub.s32 %s18, 1
        %s236 = sand.u32 %s31, 1
        %s237 = scalar_lea.sflag [#allocation3], %s236
        %s238 = sand.u32 %s31, 1
        %s239 = smul.addr %s238, 16
        %s240 = scalar_lea.vmem [#allocation2], %s239
        // Predicated region
        $region41: #{tpu_custom_call.1} parent=39 // pred_check
          %p241 = pneg %p44
        $region42: #{tpu_custom_call.1} parent=39 // pred_check_branch
          %243 = sbr.rel (%p241) target = $region44
        $region43: #{tpu_custom_call.1} parent=39 // pred_region
          %245 = dma.done %s237, 256
        $region44: #{tpu_custom_call.1} parent=39 // pred_fallthru
          _
        // Predicated region
        $region45: #{tpu_custom_call.1} parent=39 // pred_check
          %p246 = pneg %p65
        $region46: #{tpu_custom_call.1} parent=39 // pred_check_branch
          %248 = sbr.rel (%p246) target = $region48
        $region47: #{tpu_custom_call.1} parent=39 // pred_region
          %250 = dma.done [#allocation6], 3072
        $region48: #{tpu_custom_call.1} parent=39 // pred_fallthru
          _
        // Predicated region
        $region49: #{tpu_custom_call.1} parent=39 // pred_check
          %p251 = pneg %p107
        $region50: #{tpu_custom_call.1} parent=39 // pred_check_branch
          %253 = sbr.rel (%p251) target = $region52
        $region51: #{tpu_custom_call.1} parent=39 // pred_region
          %255 = dma.done [#allocation6], 3072
        $region52: #{tpu_custom_call.1} parent=39 // pred_fallthru
          _
        %s256 = sand.u32 %s31, 1
        %s257 = scalar_lea.sflag [#allocation3], %s256
        %s258 = sand.u32 %s31, 1
        %s259 = smul.addr %s258, 16
        %s260 = scalar_lea.vmem [#allocation2], %s259
        %p261 = pneg %p44
        %p262 = pneg %p41
        %p263 = pneg %p65
        %p264 = pneg %p62
        %p265 = pneg %p86
        %p266 = pneg %p83
        %p267 = pneg %p107
        %p268 = pneg %p104
        %p269 = pneg %p128
        %p270 = pneg %p125
        %p271 = pneg %p154
        %p272 = pneg %p151
        %s273 = sand.u32 %s141, 1
        %s274 = scalar_lea.sflag [#allocation4], %s273
        %s275 = sand.u32 %s141, 1
        %s276 = smul.addr %s275, 16
        %s277 = scalar_lea.vmem [#allocation8], %s276
        %s278 = smul.u32 2, %s23
        %s279 = smul.u32 2, %s23
        %v280 = vld [vmem:[%s240] sm:$0xff]
        %v281 = vld [vmem:[%s240 + $0x8] sm:$0xff]
        %v282 = vlaneseq
        %v283 = vshrl.u32 %v282, 7
        %v284 = vadd.s32 %v283, 8
        %vm285 = vcmp.lt.s32.totalorder %v283, 0
        %v286 = vsub.s32 0, %v283
        %v287 = vsel %vm285, %v286, %v283
        %v288 = vshrl.u32 %v287, 4
        %v289 = vand.u32 %v287, 15
        %v290 = vsub.s32 0, %v289
        %v291 = vsel %vm285, %v290, %v289
        %vm292 = vcmp.lt.s32.totalorder %v284, 0
        %v293 = vsub.s32 0, %v284
        %v294 = vsel %vm292, %v293, %v284
        %v295 = vshrl.u32 %v294, 4
        %v296 = vand.u32 %v294, 15
        %v297 = vsub.s32 0, %v296
        %v298 = vsel %vm292, %v297, %v296
        %vm299 = vcmp.ne.s32.totalorder %v291, 0
        %vm300 = vcmp.ne.s32.totalorder %v298, 0
        %vm301 = vcmp.lt.s32.totalorder %v291, 0
        %vm302 = vcmp.lt.s32.totalorder %v298, 0
        %vm303 = vmand %vm301, %vm299
        %vm304 = vmand %vm302, %vm300
        %v305 = vadd.s32 %v291, 16
        %v306 = vadd.s32 %v298, 16
        %v307 = vsel %vm303, %v305, %v291
        %v308 = vsel %vm304, %v306, %v298
        %vm309 = vcmp.ne.s32.totalorder %v307, 0
        %vm310 = vcmp.ne.s32.totalorder %v308, 0
        %v311 = vsel %vm309, 1, 0
        %v312 = vsel %vm310, 1, 0
        %v313 = vcvt.s32.f32 %v311
        %v314 = vcvt.s32.f32 %v312
        %vm315 = vcmp.ne.s32.totalorder %v307, 15
        %vm316 = vcmp.ne.s32.totalorder %v308, 15
        %v317 = vsel %vm315, 1, 0
        %v318 = vsel %vm316, 1, 0
        %v319 = vcvt.s32.f32 %v317
        %v320 = vcvt.s32.f32 %v318
        %v321 = vrot.slane %v280, 7
        %v322 = vrot.slane %v281, 7
        %vm323 = vcmp.lt.s32.totalorder %v283, 1
        %v324 = vsel %vm323, %v321, %v322
        %v325 = vsel %vm323, %v322, %v321
        %v326 = vmul.f32 %v325, %v313
        %v327 = vmul.f32 %v324, %v314
        %v328 = vpack.c.bf16 %v326, %v326
        %v329 = vpack.c.bf16 %v327, %v327
        %v330 = vpack.c.bf16 %v280, %v280
        %v331 = vpack.c.bf16 %v281, %v281
        %v332 = vrot.slane %v280, 1
        %v333 = vrot.slane %v281, 1
        %vm334 = vcmp.lt.s32.totalorder %v283, 7
        %v335 = vsel %vm334, %v332, %v333
        %v336 = vsel %vm334, %v333, %v332
        %v337 = vmul.f32 %v335, %v319
        %v338 = vmul.f32 %v336, %v320
        %v339 = vpack.c.bf16 %v337, %v337
        %v340 = vpack.c.bf16 %v338, %v338
        %v343 = vunpack.c.l.b16 %v328
        %v344 = vunpack.c.l.b16 %v329
        %v345 = vpack.c.b16 %v344, %v343
        %v349 = vunpack.c.l.b16 %v330
        %v350 = vunpack.c.l.b16 %v331
        %v351 = vpack.c.b16 %v350, %v349
        %v355 = vunpack.c.l.b16 %v339
        %v356 = vunpack.c.l.b16 %v340
        %v357 = vpack.c.b16 %v356, %v355
        %v359 = vld [vmem:[#allocation5] sm:$0xf]
        %v360 = vld [vmem:[#allocation5 + $0x4] sm:$0xf]
        %v361 = vld [vmem:[#allocation5 + $0x8] sm:$0xf]
        %v362 = vld [vmem:[#allocation5 + $0xc] sm:$0xf]
        %v363 = vld [vmem:[#allocation5 + $0x10] sm:$0xf]
        %v364 = vld [vmem:[#allocation5 + $0x14] sm:$0xf]
        %v365 = vld [vmem:[#allocation5 + $0x18] sm:$0xf]
        %v366 = vld [vmem:[#allocation5 + $0x1c] sm:$0xf]
        %v367 = vld [vmem:[#allocation5 + $0x20] sm:$0xf]
        %v368 = vld [vmem:[#allocation5 + $0x24] sm:$0xf]
        %v369 = vld [vmem:[#allocation5 + $0x28] sm:$0xf]
        %v370 = vld [vmem:[#allocation5 + $0x2c] sm:$0xf]
        %v371 = vld [vmem:[#allocation5 + $0x30] sm:$0xf]
        %v372 = vld [vmem:[#allocation5 + $0x34] sm:$0xf]
        %v373 = vld [vmem:[#allocation5 + $0x38] sm:$0xf]
        %v374 = vld [vmem:[#allocation5 + $0x3c] sm:$0xf]
        %v375 = vld [vmem:[#allocation5 + $0x40] sm:$0xf]
        %v376 = vld [vmem:[#allocation5 + $0x44] sm:$0xf]
        %v377 = vld [vmem:[#allocation5 + $0x48] sm:$0xf]
        %v378 = vld [vmem:[#allocation5 + $0x4c] sm:$0xf]
        %v379 = vld [vmem:[#allocation5 + $0x50] sm:$0xf]
        %v380 = vld [vmem:[#allocation5 + $0x54] sm:$0xf]
        %v381 = vld [vmem:[#allocation5 + $0x58] sm:$0xf]
        %v382 = vld [vmem:[#allocation5 + $0x5c] sm:$0xf]
        %v383 = vld [vmem:[#allocation5 + $0x60] sm:$0xf]
        %v384 = vld [vmem:[#allocation5 + $0x64] sm:$0xf]
        %v385 = vld [vmem:[#allocation5 + $0x68] sm:$0xf]
        %v386 = vld [vmem:[#allocation5 + $0x6c] sm:$0xf]
        %v387 = vld [vmem:[#allocation5 + $0x70] sm:$0xf]
        %v388 = vld [vmem:[#allocation5 + $0x74] sm:$0xf]
        %v389 = vld [vmem:[#allocation5 + $0x78] sm:$0xf]
        %v390 = vld [vmem:[#allocation5 + $0x7c] sm:$0xf]
        %v391 = vld [vmem:[#allocation5 + $0x80] sm:$0xf]
        %v392 = vld [vmem:[#allocation5 + $0x84] sm:$0xf]
        %v393 = vld [vmem:[#allocation5 + $0x88] sm:$0xf]
        %v394 = vld [vmem:[#allocation5 + $0x8c] sm:$0xf]
        %v395 = vld [vmem:[#allocation5 + $0x90] sm:$0xf]
        %v396 = vld [vmem:[#allocation5 + $0x94] sm:$0xf]
        %v397 = vld [vmem:[#allocation5 + $0x98] sm:$0xf]
        %v398 = vld [vmem:[#allocation5 + $0x9c] sm:$0xf]
        %v399 = vld [vmem:[#allocation5 + $0xa0] sm:$0xf]
        %v400 = vld [vmem:[#allocation5 + $0xa4] sm:$0xf]
        %v401 = vld [vmem:[#allocation5 + $0xa8] sm:$0xf]
        %v402 = vld [vmem:[#allocation5 + $0xac] sm:$0xf]
        %v403 = vld [vmem:[#allocation5 + $0xb0] sm:$0xf]
        %v404 = vld [vmem:[#allocation5 + $0xb4] sm:$0xf]
        %v405 = vld [vmem:[#allocation5 + $0xb8] sm:$0xf]
        %v406 = vld [vmem:[#allocation5 + $0xbc] sm:$0xf]
        %v407 = vld [vmem:[%s2] sm:$0x1]
        %v409 = vperm.slane %v407, 0
        %v459 = vunpack.c.l.b16 %v359
        %v460 = vunpack.c.l.b16 %v360
        %v461 = vunpack.c.l.b16 %v361
        %v462 = vunpack.c.l.b16 %v362
        %v463 = vunpack.c.l.b16 %v363
        %v464 = vunpack.c.l.b16 %v364
        %v465 = vunpack.c.l.b16 %v365
        %v466 = vunpack.c.l.b16 %v366
        %v467 = vunpack.c.l.b16 %v367
        %v468 = vunpack.c.l.b16 %v368
        %v469 = vunpack.c.l.b16 %v369
        %v470 = vunpack.c.l.b16 %v370
        %v471 = vunpack.c.l.b16 %v371
        %v472 = vunpack.c.l.b16 %v372
        %v473 = vunpack.c.l.b16 %v373
        %v474 = vunpack.c.l.b16 %v374
        %v475 = vunpack.c.l.b16 %v375
        %v476 = vunpack.c.l.b16 %v376
        %v477 = vunpack.c.l.b16 %v377
        %v478 = vunpack.c.l.b16 %v378
        %v479 = vunpack.c.l.b16 %v379
        %v480 = vunpack.c.l.b16 %v380
        %v481 = vunpack.c.l.b16 %v381
        %v482 = vunpack.c.l.b16 %v382
        %v483 = vunpack.c.l.b16 %v383
        %v484 = vunpack.c.l.b16 %v384
        %v485 = vunpack.c.l.b16 %v385
        %v486 = vunpack.c.l.b16 %v386
        %v487 = vunpack.c.l.b16 %v387
        %v488 = vunpack.c.l.b16 %v388
        %v489 = vunpack.c.l.b16 %v389
        %v490 = vunpack.c.l.b16 %v390
        %v491 = vunpack.c.l.b16 %v391
        %v492 = vunpack.c.l.b16 %v392
        %v493 = vunpack.c.l.b16 %v393
        %v494 = vunpack.c.l.b16 %v394
        %v495 = vunpack.c.l.b16 %v395
        %v496 = vunpack.c.l.b16 %v396
        %v497 = vunpack.c.l.b16 %v397
        %v498 = vunpack.c.l.b16 %v398
        %v499 = vunpack.c.l.b16 %v399
        %v500 = vunpack.c.l.b16 %v400
        %v501 = vunpack.c.l.b16 %v401
        %v502 = vunpack.c.l.b16 %v402
        %v503 = vunpack.c.l.b16 %v403
        %v504 = vunpack.c.l.b16 %v404
        %v505 = vunpack.c.l.b16 %v405
        %v506 = vunpack.c.l.b16 %v406
        %v507 = vpack.c.b16 %v460, %v459
        %v508 = vpack.c.b16 %v462, %v461
        %v509 = vpack.c.b16 %v464, %v463
        %v510 = vpack.c.b16 %v466, %v465
        %v511 = vpack.c.b16 %v468, %v467
        %v512 = vpack.c.b16 %v470, %v469
        %v513 = vpack.c.b16 %v472, %v471
        %v514 = vpack.c.b16 %v474, %v473
        %v515 = vpack.c.b16 %v476, %v475
        %v516 = vpack.c.b16 %v478, %v477
        %v517 = vpack.c.b16 %v480, %v479
        %v518 = vpack.c.b16 %v482, %v481
        %v519 = vpack.c.b16 %v484, %v483
        %v520 = vpack.c.b16 %v486, %v485
        %v521 = vpack.c.b16 %v488, %v487
        %v522 = vpack.c.b16 %v490, %v489
        %v523 = vpack.c.b16 %v492, %v491
        %v524 = vpack.c.b16 %v494, %v493
        %v525 = vpack.c.b16 %v496, %v495
        %v526 = vpack.c.b16 %v498, %v497
        %v527 = vpack.c.b16 %v500, %v499
        %v528 = vpack.c.b16 %v502, %v501
        %v529 = vpack.c.b16 %v504, %v503
        %v530 = vpack.c.b16 %v506, %v505
        %555 = vmatpush.bf16.msra.mxu0 %v514
        %556 = vmatpush.bf16.msra.mxu0 %v513
        %557 = vmatpush.bf16.msra.mxu0 %v512
        %558 = vmatpush.bf16.msra.mxu0 %v511
        %559 = vmatpush.bf16.msra.mxu0 %v510
        %560 = vmatpush.bf16.msra.mxu0 %v509
        %561 = vmatpush.bf16.msra.mxu0 %v508
        %562 = vmatpush.bf16.msra.mxu0 %v507
        %563 = vmatmul.bf16.gmra.mxu0 %v345
        %v564 = vpop.f32.mrf.mxu0
        %v565 = vadd.f32 %v409, %v564
        %v566 = vpop.f32.mrf.mxu0
        %v567 = vadd.f32 %v409, %v566
        %568 = vdwg.mxu0
        %569 = vmatpush.bf16.msra.mxu0 %v522
        %570 = vmatpush.bf16.msra.mxu0 %v521
        %571 = vmatpush.bf16.msra.mxu0 %v520
        %572 = vmatpush.bf16.msra.mxu0 %v519
        %573 = vmatpush.bf16.msra.mxu0 %v518
        %574 = vmatpush.bf16.msra.mxu0 %v517
        %575 = vmatpush.bf16.msra.mxu0 %v516
        %576 = vmatpush.bf16.msra.mxu0 %v515
        %577 = vmatmul.bf16.gmra.mxu0 %v351
        %v578 = vpop.f32.mrf.mxu0
        %v579 = vadd.f32 %v565, %v578
        %v580 = vpop.f32.mrf.mxu0
        %v581 = vadd.f32 %v567, %v580
        %582 = vdwg.mxu0
        %583 = vmatpush.bf16.msra.mxu0 %v530
        %584 = vmatpush.bf16.msra.mxu0 %v529
        %585 = vmatpush.bf16.msra.mxu0 %v528
        %586 = vmatpush.bf16.msra.mxu0 %v527
        %587 = vmatpush.bf16.msra.mxu0 %v526
        %588 = vmatpush.bf16.msra.mxu0 %v525
        %589 = vmatpush.bf16.msra.mxu0 %v524
        %590 = vmatpush.bf16.msra.mxu0 %v523
        %591 = vmatmul.bf16.gmra.mxu0 %v357
        %v592 = vpop.f32.mrf.mxu0
        %v593 = vadd.f32 %v579, %v592
        %v594 = vpop.f32.mrf.mxu0
        %v595 = vadd.f32 %v581, %v594
        %596 = vdwg.mxu0
        %v597 = vmax.f32 %v593, 0.0
        %v598 = vmax.f32 %v595, 0.0
        %v599 = vrot.slane %v597, 7
        %v600 = vrot.slane %v598, 7
        %v601 = vsel %vm323, %v599, %v600
        %v602 = vsel %vm323, %v600, %v599
        %v603 = vmul.f32 %v602, %v313
        %v604 = vmul.f32 %v601, %v314
        %v605 = vpack.c.bf16 %v603, %v603
        %v606 = vpack.c.bf16 %v604, %v604
        %v607 = vpack.c.bf16 %v597, %v597
        %v608 = vpack.c.bf16 %v598, %v598
        %v609 = vrot.slane %v597, 1
        %v610 = vrot.slane %v598, 1
        %v611 = vsel %vm334, %v609, %v610
        %v612 = vsel %vm334, %v610, %v609
        %v613 = vmul.f32 %v611, %v319
        %v614 = vmul.f32 %v612, %v320
        %v615 = vpack.c.bf16 %v613, %v613
        %v616 = vpack.c.bf16 %v614, %v614
        %v619 = vunpack.c.l.b16 %v605
        %v620 = vunpack.c.l.b16 %v606
        %v621 = vpack.c.b16 %v620, %v619
        %v625 = vunpack.c.l.b16 %v607
        %v626 = vunpack.c.l.b16 %v608
        %v627 = vpack.c.b16 %v626, %v625
        %v631 = vunpack.c.l.b16 %v615
        %v632 = vunpack.c.l.b16 %v616
        %v633 = vpack.c.b16 %v632, %v631
        %v635 = vld [vmem:[#allocation7] sm:$0xf]
        %v636 = vld [vmem:[#allocation7 + $0x4] sm:$0xf]
        %v637 = vld [vmem:[#allocation7 + $0x8] sm:$0xf]
        %v638 = vld [vmem:[#allocation7 + $0xc] sm:$0xf]
        %v639 = vld [vmem:[#allocation7 + $0x10] sm:$0xf]
        %v640 = vld [vmem:[#allocation7 + $0x14] sm:$0xf]
        %v641 = vld [vmem:[#allocation7 + $0x18] sm:$0xf]
        %v642 = vld [vmem:[#allocation7 + $0x1c] sm:$0xf]
        %v643 = vld [vmem:[#allocation7 + $0x20] sm:$0xf]
        %v644 = vld [vmem:[#allocation7 + $0x24] sm:$0xf]
        %v645 = vld [vmem:[#allocation7 + $0x28] sm:$0xf]
        %v646 = vld [vmem:[#allocation7 + $0x2c] sm:$0xf]
        %v647 = vld [vmem:[#allocation7 + $0x30] sm:$0xf]
        %v648 = vld [vmem:[#allocation7 + $0x34] sm:$0xf]
        %v649 = vld [vmem:[#allocation7 + $0x38] sm:$0xf]
        %v650 = vld [vmem:[#allocation7 + $0x3c] sm:$0xf]
        %v651 = vld [vmem:[#allocation7 + $0x40] sm:$0xf]
        %v652 = vld [vmem:[#allocation7 + $0x44] sm:$0xf]
        %v653 = vld [vmem:[#allocation7 + $0x48] sm:$0xf]
        %v654 = vld [vmem:[#allocation7 + $0x4c] sm:$0xf]
        %v655 = vld [vmem:[#allocation7 + $0x50] sm:$0xf]
        %v656 = vld [vmem:[#allocation7 + $0x54] sm:$0xf]
        %v657 = vld [vmem:[#allocation7 + $0x58] sm:$0xf]
        %v658 = vld [vmem:[#allocation7 + $0x5c] sm:$0xf]
        %v659 = vld [vmem:[#allocation7 + $0x60] sm:$0xf]
        %v660 = vld [vmem:[#allocation7 + $0x64] sm:$0xf]
        %v661 = vld [vmem:[#allocation7 + $0x68] sm:$0xf]
        %v662 = vld [vmem:[#allocation7 + $0x6c] sm:$0xf]
        %v663 = vld [vmem:[#allocation7 + $0x70] sm:$0xf]
        %v664 = vld [vmem:[#allocation7 + $0x74] sm:$0xf]
        %v665 = vld [vmem:[#allocation7 + $0x78] sm:$0xf]
        %v666 = vld [vmem:[#allocation7 + $0x7c] sm:$0xf]
        %v667 = vld [vmem:[#allocation7 + $0x80] sm:$0xf]
        %v668 = vld [vmem:[#allocation7 + $0x84] sm:$0xf]
        %v669 = vld [vmem:[#allocation7 + $0x88] sm:$0xf]
        %v670 = vld [vmem:[#allocation7 + $0x8c] sm:$0xf]
        %v671 = vld [vmem:[#allocation7 + $0x90] sm:$0xf]
        %v672 = vld [vmem:[#allocation7 + $0x94] sm:$0xf]
        %v673 = vld [vmem:[#allocation7 + $0x98] sm:$0xf]
        %v674 = vld [vmem:[#allocation7 + $0x9c] sm:$0xf]
        %v675 = vld [vmem:[#allocation7 + $0xa0] sm:$0xf]
        %v676 = vld [vmem:[#allocation7 + $0xa4] sm:$0xf]
        %v677 = vld [vmem:[#allocation7 + $0xa8] sm:$0xf]
        %v678 = vld [vmem:[#allocation7 + $0xac] sm:$0xf]
        %v679 = vld [vmem:[#allocation7 + $0xb0] sm:$0xf]
        %v680 = vld [vmem:[#allocation7 + $0xb4] sm:$0xf]
        %v681 = vld [vmem:[#allocation7 + $0xb8] sm:$0xf]
        %v682 = vld [vmem:[#allocation7 + $0xbc] sm:$0xf]
        %v683 = vld [vmem:[%s4] sm:$0x1]
        %v685 = vperm.slane %v683, 0
        %v735 = vunpack.c.l.b16 %v635
        %v736 = vunpack.c.l.b16 %v636
        %v737 = vunpack.c.l.b16 %v637
        %v738 = vunpack.c.l.b16 %v638
        %v739 = vunpack.c.l.b16 %v639
        %v740 = vunpack.c.l.b16 %v640
        %v741 = vunpack.c.l.b16 %v641
        %v742 = vunpack.c.l.b16 %v642
        %v743 = vunpack.c.l.b16 %v643
        %v744 = vunpack.c.l.b16 %v644
        %v745 = vunpack.c.l.b16 %v645
        %v746 = vunpack.c.l.b16 %v646
        %v747 = vunpack.c.l.b16 %v647
        %v748 = vunpack.c.l.b16 %v648
        %v749 = vunpack.c.l.b16 %v649
        %v750 = vunpack.c.l.b16 %v650
        %v751 = vunpack.c.l.b16 %v651
        %v752 = vunpack.c.l.b16 %v652
        %v753 = vunpack.c.l.b16 %v653
        %v754 = vunpack.c.l.b16 %v654
        %v755 = vunpack.c.l.b16 %v655
        %v756 = vunpack.c.l.b16 %v656
        %v757 = vunpack.c.l.b16 %v657
        %v758 = vunpack.c.l.b16 %v658
        %v759 = vunpack.c.l.b16 %v659
        %v760 = vunpack.c.l.b16 %v660
        %v761 = vunpack.c.l.b16 %v661
        %v762 = vunpack.c.l.b16 %v662
        %v763 = vunpack.c.l.b16 %v663
        %v764 = vunpack.c.l.b16 %v664
        %v765 = vunpack.c.l.b16 %v665
        %v766 = vunpack.c.l.b16 %v666
        %v767 = vunpack.c.l.b16 %v667
        %v768 = vunpack.c.l.b16 %v668
        %v769 = vunpack.c.l.b16 %v669
        %v770 = vunpack.c.l.b16 %v670
        %v771 = vunpack.c.l.b16 %v671
        %v772 = vunpack.c.l.b16 %v672
        %v773 = vunpack.c.l.b16 %v673
        %v774 = vunpack.c.l.b16 %v674
        %v775 = vunpack.c.l.b16 %v675
        %v776 = vunpack.c.l.b16 %v676
        %v777 = vunpack.c.l.b16 %v677
        %v778 = vunpack.c.l.b16 %v678
        %v779 = vunpack.c.l.b16 %v679
        %v780 = vunpack.c.l.b16 %v680
        %v781 = vunpack.c.l.b16 %v681
        %v782 = vunpack.c.l.b16 %v682
        %v783 = vpack.c.b16 %v736, %v735
        %v784 = vpack.c.b16 %v738, %v737
        %v785 = vpack.c.b16 %v740, %v739
        %v786 = vpack.c.b16 %v742, %v741
        %v787 = vpack.c.b16 %v744, %v743
        %v788 = vpack.c.b16 %v746, %v745
        %v789 = vpack.c.b16 %v748, %v747
        %v790 = vpack.c.b16 %v750, %v749
        %v791 = vpack.c.b16 %v752, %v751
        %v792 = vpack.c.b16 %v754, %v753
        %v793 = vpack.c.b16 %v756, %v755
        %v794 = vpack.c.b16 %v758, %v757
        %v795 = vpack.c.b16 %v760, %v759
        %v796 = vpack.c.b16 %v762, %v761
        %v797 = vpack.c.b16 %v764, %v763
        %v798 = vpack.c.b16 %v766, %v765
        %v799 = vpack.c.b16 %v768, %v767
        %v800 = vpack.c.b16 %v770, %v769
        %v801 = vpack.c.b16 %v772, %v771
        %v802 = vpack.c.b16 %v774, %v773
        %v803 = vpack.c.b16 %v776, %v775
        %v804 = vpack.c.b16 %v778, %v777
        %v805 = vpack.c.b16 %v780, %v779
        %v806 = vpack.c.b16 %v782, %v781
        %831 = vmatpush.bf16.msra.mxu0 %v790
        %832 = vmatpush.bf16.msra.mxu0 %v789
        %833 = vmatpush.bf16.msra.mxu0 %v788
        %834 = vmatpush.bf16.msra.mxu0 %v787
        %835 = vmatpush.bf16.msra.mxu0 %v786
        %836 = vmatpush.bf16.msra.mxu0 %v785
        %837 = vmatpush.bf16.msra.mxu0 %v784
        %838 = vmatpush.bf16.msra.mxu0 %v783
        %839 = vmatmul.bf16.gmra.mxu0 %v621
        %v840 = vpop.f32.mrf.mxu0
        %v841 = vadd.f32 %v685, %v840
        %v842 = vpop.f32.mrf.mxu0
        %v843 = vadd.f32 %v685, %v842
        %844 = vdwg.mxu0
        %845 = vmatpush.bf16.msra.mxu0 %v798
        %846 = vmatpush.bf16.msra.mxu0 %v797
        %847 = vmatpush.bf16.msra.mxu0 %v796
        %848 = vmatpush.bf16.msra.mxu0 %v795
        %849 = vmatpush.bf16.msra.mxu0 %v794
        %850 = vmatpush.bf16.msra.mxu0 %v793
        %851 = vmatpush.bf16.msra.mxu0 %v792
        %852 = vmatpush.bf16.msra.mxu0 %v791
        %853 = vmatmul.bf16.gmra.mxu0 %v627
        %v854 = vpop.f32.mrf.mxu0
        %v855 = vadd.f32 %v841, %v854
        %v856 = vpop.f32.mrf.mxu0
        %v857 = vadd.f32 %v843, %v856
        %858 = vdwg.mxu0
        %859 = vmatpush.bf16.msra.mxu0 %v806
        %860 = vmatpush.bf16.msra.mxu0 %v805
        %861 = vmatpush.bf16.msra.mxu0 %v804
        %862 = vmatpush.bf16.msra.mxu0 %v803
        %863 = vmatpush.bf16.msra.mxu0 %v802
        %864 = vmatpush.bf16.msra.mxu0 %v801
        %865 = vmatpush.bf16.msra.mxu0 %v800
        %866 = vmatpush.bf16.msra.mxu0 %v799
        %867 = vmatmul.bf16.gmra.mxu0 %v633
        %v868 = vpop.f32.mrf.mxu0
        %v869 = vadd.f32 %v855, %v868
        %v870 = vpop.f32.mrf.mxu0
        %v871 = vadd.f32 %v857, %v870
        %872 = vdwg.mxu0
        %v873 = vadd.f32 %v280, %v869
        %v874 = vadd.f32 %v281, %v871
        %875 = vst [vmem:[%s277] sm:$0xff] %v873
        %876 = vst [vmem:[%s277 + $0x8] sm:$0xff] %v874
        %s877 = sand.u32 %s141, 1
        %s878 = scalar_lea.sflag [#allocation4], %s877
        %s879 = sand.u32 %s141, 1
        %s880 = smul.addr %s879, 16
        %s881 = scalar_lea.vmem [#allocation8], %s880
        // Predicated region
        $region53: #{tpu_custom_call.1} parent=39 // pred_check
          %p882 = pneg %p151
        $region54: #{tpu_custom_call.1} parent=39 // pred_check_branch
          %884 = sbr.rel (%p882) target = $region56
        $region55: #{tpu_custom_call.1} parent=39 // pred_region
          %s885 = smul.u32 2, %s23
          %887 = vsyncadd %s878, 0
          %s888 = smul.addr %s885, 8
          %s889 = scalar_lea.hbm %s5, %s888
          %s890 = sshll.u32 %s881, 4
          %s891 = int_to_ptr.vmem [resolvable:$true] %s890
          %s892 = sshll.u32 %s889, 4
          %s893 = int_to_ptr.hbm [resolvable:$true] %s892
          %898 = dma.vmem_to_hbm [thread:$0]  %s891, 256, %s893, %s878, 128, 128, 8
        $region56: #{tpu_custom_call.1} parent=39 // pred_fallthru
          _
      $region40: #{tpu_custom_call.1} parent=5 // pred_fallthru
        _
      %p899 = scmp.le.s32.totalorder 2, %s18
      // Predicated region
      $region57: #{tpu_custom_call.1} parent=5 // pred_check
        %p900 = pneg %p899
      $region58: #{tpu_custom_call.1} parent=5 // pred_check_branch
        %902 = sbr.rel (%p900) target = $region60
      $region59: #{tpu_custom_call.1} parent=5 // pred_region
        %s903 = ssub.s32 %s18, 2
        // Predicated region
        $region61: #{tpu_custom_call.1} parent=59 // pred_check
          %p904 = pneg %p157
        $region62: #{tpu_custom_call.1} parent=59 // pred_check_branch
          %906 = sbr.rel (%p904) target = $region64
        $region63: #{tpu_custom_call.1} parent=59 // pred_region
          %s907 = sand.u32 %s142, 1
          %s908 = scalar_lea.sflag [#allocation4], %s907
          %s909 = sand.u32 %s142, 1
          %s910 = smul.addr %s909, 16
          %s911 = scalar_lea.vmem [#allocation8], %s910
          %913 = dma.done %s908, 256
        $region64: #{tpu_custom_call.1} parent=59 // pred_fallthru
          _
      $region60: #{tpu_custom_call.1} parent=5 // pred_fallthru
        _
    $region6: #{tpu_custom_call.1} parent=1 // loop_footer
      %s22 = sadd.s32 1, %s18
    $region7: #{tpu_custom_call.1} parent=1 // loop_footer_branch
      %17 = sbr.rel target = $region3
    $region8: #{tpu_custom_call.1} parent=1 // loop_exit
      _
    %914 = vsyncpa [#allocation3], 1
    %s915 = scalar_lea.sflag [#allocation3], 1
    %916 = vsyncpa %s915, 1
    %917 = vsyncpa [#allocation6], 1
    %918 = vsyncpa [#allocation4], 1
    %s919 = scalar_lea.sflag [#allocation4], 1
    %920 = vsyncpa %s919, 1

// kernel: tpu_custom_call.1
$region0: #{tpu_custom_call.1}
  #allocation0 [shape = 'u32[]', space=smem, size = 0x4, offset = 0x4, fixed_abs, tag = 'smem constant byte address 0x4 - core index']
  #allocation1 [shape = 'u32[72,128]{1,0:T(1,128)}', space=vmem, size = 0x9000, scoped, tag = 'internal scratch']
  %s0 = inlined_call_operand.hbm [shape: f32[32,128], index: 0, kind: input, shape index: {}]
  %s1 = inlined_call_operand.hbm [shape: bf16[384,128], index: 1, kind: input, shape index: {}]
  %s2 = inlined_call_operand.vmem [shape: f32[1,128], index: 2, kind: input, shape index: {}]
  %s3 = inlined_call_operand.hbm [shape: bf16[384,128], index: 3, kind: input, shape index: {}]
  %s4 = inlined_call_operand.vmem [shape: f32[1,128], index: 4, kind: input, shape index: {}]
  %s5 = inlined_call_operand.hbm [shape: f32[32,128], index: 5, kind: output, shape index: {}]
  %s6 = sld [smem:[#allocation0]]
  $region65: #{tpu_custom_call.1} parent=0
    _
  %s8 = ssub.s32 1, %s6
  %s9 = scalar_select 0, %s8, %s6
  $region1: #{tpu_custom_call.1} parent=0
    #allocation2 [shape = 'u8[16384]{0}', space=vmem, size = 0x4000, scoped, tag = 'input window, operand 0']
    #allocation3 [shape = 's32[2]{0}', space=sflag, size = 0x8, scoped, tag = 'scoped memory for tpu_custom_call.1']
    #allocation4 [shape = 's32[2]{0}', space=sflag, size = 0x8, scoped, tag = 'scoped memory for tpu_custom_call.1']
    #allocation5 [shape = 'u8[98304]{0}', space=vmem, size = 0x18000, scoped, tag = 'input window, operand 1, single buffered']
    #allocation6 [shape = 's32[1]{0}', space=sflag, size = 0x4, scoped, tag = 'scoped memory for tpu_custom_call.1']
    #allocation7 [shape = 'u8[98304]{0}', space=vmem, size = 0x18000, scoped, tag = 'input window, operand 3, single buffered']
    #allocation8 [shape = 'u8[16384]{0}', space=vmem, size = 0x4000, scoped, tag = 'output window, operand 0']
    %10 = vsyncpa [#allocation3], 0
    %s11 = scalar_lea.sflag [#allocation3], 1
    %12 = vsyncpa %s11, 0
    %13 = vsyncpa [#allocation6], 0
    %14 = vsyncpa [#allocation4], 0
    %s15 = scalar_lea.sflag [#allocation4], 1
    %16 = vsyncpa %s15, 0
    loop: start=0, step=1, limit=4
    $region2: #{tpu_custom_call.1} parent=1 // loop_pre_header
      _
    $region3: #{tpu_custom_call.1} parent=1 // loop_header
      %s18 = sphi 0, %s22
      %p19 = scmp.ge.s32.totalorder %s18, 4
      %s28 = sphi 0, %s30
      %s31 = sphi 0, %s28
      %s32 = sphi 0, %s31
      %s48 = sphi 0, %s32
      %s52 = sphi 0, %s52
      %s54 = sphi 0, %s52
      %s55 = sphi 0, %s54
      %s69 = sphi 0, %s55
      %s73 = sphi 0, %s73
      %s75 = sphi 0, %s73
      %s76 = sphi 0, %s75
      %s90 = sphi 0, %s76
      %s94 = sphi 0, %s94
      %s96 = sphi 0, %s94
      %s97 = sphi 0, %s96
      %s111 = sphi 0, %s97
      %s115 = sphi 0, %s115
      %s117 = sphi 0, %s115
      %s118 = sphi 0, %s117
      %s132 = sphi 0, %s118
      %s138 = sphi 0, %s140
      %s141 = sphi 0, %s138
      %s142 = sphi 0, %s141
      %s158 = sphi 0, %s142
    $region4: #{tpu_custom_call.1} parent=1 // loop_header_branch
      %21 = sbr.rel (%p19) target = $region8
    $region5: #{tpu_custom_call.1} parent=1 // loop_body
      %s23 = ssub.s32 %s18, 1
      %s24 = ssub.s32 %s18, 2
      %s25 = sadd.s32 %s18, 1
      %s26 = ssub.s32 %s18, %s25
      %p27 = scmp.eq.s32.totalorder %s26, 0
      %s29 = sadd.s32 %s28, 1
      %s30 = scalar_select %p27, %s28, %s29
      %p33 = pneg %p27
      %p34 = scmp.eq.s32.totalorder %s18, 1
      %p35 = por %p33, %p34
      %p36 = scmp.ne.s32.totalorder %s28, %s31
      %p37 = scmp.eq.s32.totalorder %s18, 0
      %p38 = por %p36, %p37
      %p39 = scmp.ne.s32.totalorder %s28, %s31
      %p40 = scmp.eq.s32.totalorder %s23, 1
      %p41 = por %p39, %p40
      %p42 = scmp.ne.s32.totalorder %s31, %s32
      %p43 = scmp.eq.s32.totalorder %s23, 0
      %p44 = por %p42, %p43
      %p45 = scmp.ne.s32.totalorder %s31, %s32
      %p46 = scmp.eq.s32.totalorder %s24, 1
      %p47 = por %p45, %p46
      %p49 = scmp.ne.s32.totalorder %s32, %s48
      %p50 = scmp.eq.s32.totalorder %s24, 0
      %p51 = por %p49, %p50
      %s53 = sadd.s32 %s52, 1
      %p56 = scmp.eq.s32.totalorder %s18, 1
      %p57 = scmp.ne.s32.totalorder %s52, %s54
      %p58 = scmp.eq.s32.totalorder %s18, 0
      %p59 = por %p57, %p58
      %p60 = scmp.ne.s32.totalorder %s52, %s54
      %p61 = scmp.eq.s32.totalorder %s23, 1
      %p62 = por %p60, %p61
      %p63 = scmp.ne.s32.totalorder %s54, %s55
      %p64 = scmp.eq.s32.totalorder %s23, 0
      %p65 = por %p63, %p64
      %p66 = scmp.ne.s32.totalorder %s54, %s55
      %p67 = scmp.eq.s32.totalorder %s24, 1
      %p68 = por %p66, %p67
      %p70 = scmp.ne.s32.totalorder %s55, %s69
      %p71 = scmp.eq.s32.totalorder %s24, 0
      %p72 = por %p70, %p71
      %s74 = sadd.s32 %s73, 1
      %p77 = scmp.eq.s32.totalorder %s18, 1
      %p78 = scmp.ne.s32.totalorder %s73, %s75
      %p79 = scmp.eq.s32.totalorder %s18, 0
      %p80 = por %p78, %p79
      %p81 = scmp.ne.s32.totalorder %s73, %s75
      %p82 = scmp.eq.s32.totalorder %s23, 1
      %p83 = por %p81, %p82
      %p84 = scmp.ne.s32.totalorder %s75, %s76
      %p85 = scmp.eq.s32.totalorder %s23, 0
      %p86 = por %p84, %p85
      %p87 = scmp.ne.s32.totalorder %s75, %s76
      %p88 = scmp.eq.s32.totalorder %s24, 1
      %p89 = por %p87, %p88
      %p91 = scmp.ne.s32.totalorder %s76, %s90
      %p92 = scmp.eq.s32.totalorder %s24, 0
      %p93 = por %p91, %p92
      %s95 = sadd.s32 %s94, 1
      %p98 = scmp.eq.s32.totalorder %s18, 1
      %p99 = scmp.ne.s32.totalorder %s94, %s96
      %p100 = scmp.eq.s32.totalorder %s18, 0
      %p101 = por %p99, %p100
      %p102 = scmp.ne.s32.totalorder %s94, %s96
      %p103 = scmp.eq.s32.totalorder %s23, 1
      %p104 = por %p102, %p103
      %p105 = scmp.ne.s32.totalorder %s96, %s97
      %p106 = scmp.eq.s32.totalorder %s23, 0
      %p107 = por %p105, %p106
      %p108 = scmp.ne.s32.totalorder %s96, %s97
      %p109 = scmp.eq.s32.totalorder %s24, 1
      %p110 = por %p108, %p109
      %p112 = scmp.ne.s32.totalorder %s97, %s111
      %p113 = scmp.eq.s32.totalorder %s24, 0
      %p114 = por %p112, %p113
      %s116 = sadd.s32 %s115, 1
      %p119 = scmp.eq.s32.totalorder %s18, 1
      %p120 = scmp.ne.s32.totalorder %s115, %s117
      %p121 = scmp.eq.s32.totalorder %s18, 0
      %p122 = por %p120, %p121
      %p123 = scmp.ne.s32.totalorder %s115, %s117
      %p124 = scmp.eq.s32.totalorder %s23, 1
      %p125 = por %p123, %p124
      %p126 = scmp.ne.s32.totalorder %s117, %s118
      %p127 = scmp.eq.s32.totalorder %s23, 0
      %p128 = por %p126, %p127
      %p129 = scmp.ne.s32.totalorder %s117, %s118
      %p130 = scmp.eq.s32.totalorder %s24, 1
      %p131 = por %p129, %p130
      %p133 = scmp.ne.s32.totalorder %s118, %s132
      %p134 = scmp.eq.s32.totalorder %s24, 0
      %p135 = por %p133, %p134
      %s136 = ssub.s32 %s18, %s25
      %p137 = scmp.eq.s32.totalorder %s136, 0
      %s139 = sadd.s32 %s138, 1
      %s140 = scalar_select %p137, %s138, %s139
      %p143 = pneg %p137
      %p144 = scmp.eq.s32.totalorder %s18, 1
      %p145 = por %p143, %p144
      %p146 = scmp.ne.s32.totalorder %s138, %s141
      %p147 = scmp.eq.s32.totalorder %s18, 0
      %p148 = por %p146, %p147
      %p149 = scmp.ne.s32.totalorder %s138, %s141
      %p150 = scmp.eq.s32.totalorder %s23, 1
      %p151 = por %p149, %p150
      %p152 = scmp.ne.s32.totalorder %s141, %s142
      %p153 = scmp.eq.s32.totalorder %s23, 0
      %p154 = por %p152, %p153
      %p155 = scmp.ne.s32.totalorder %s141, %s142
      %p156 = scmp.eq.s32.totalorder %s24, 1
      %p157 = por %p155, %p156
      %p159 = scmp.ne.s32.totalorder %s142, %s158
      %p160 = scmp.eq.s32.totalorder %s24, 0
      %p161 = por %p159, %p160
      %p162 = scmp.le.s32.totalorder 1, %s18
      %p163 = scmp.lt.s32.totalorder %s18, 3
      %p164 = pnand %p162, %p163
      %p165 = pneg %p164
      // Predicated region
      $region9: #{tpu_custom_call.1} parent=5 // pred_check
        _
      $region10: #{tpu_custom_call.1} parent=5 // pred_check_branch
        %167 = sbr.rel (%p164) target = $region12
      $region11: #{tpu_custom_call.1} parent=5 // pred_region
        %s168 = ssub.s32 %s18, 1
        // Predicated region
        $region13: #{tpu_custom_call.1} parent=11 // pred_check
          %p169 = pneg %p65
        $region14: #{tpu_custom_call.1} parent=11 // pred_check_branch
          %171 = sbr.rel (%p169) target = $region16
        $region15: #{tpu_custom_call.1} parent=11 // pred_region
          %173 = vsyncadd [#allocation6], 0
          %s174 = sshll.u32 %s1, 4
          %s175 = int_to_ptr.hbm [resolvable:$true] %s174
          %s176 = sshll.u32 [#allocation5], 4
          %s177 = int_to_ptr.vmem [resolvable:$true] %s176
          %182 = dma.hbm_to_vmem [thread:$0]  %s175, 3072, %s177, [#allocation6], 64, 64, 4
        $region16: #{tpu_custom_call.1} parent=11 // pred_fallthru
          _
        // Predicated region
        $region17: #{tpu_custom_call.1} parent=11 // pred_check
          %p183 = pneg %p86
        $region18: #{tpu_custom_call.1} parent=11 // pred_check_branch
          %185 = sbr.rel (%p183) target = $region20
        $region19: #{tpu_custom_call.1} parent=11 // pred_region
          _
        $region20: #{tpu_custom_call.1} parent=11 // pred_fallthru
          _
        // Predicated region
        $region21: #{tpu_custom_call.1} parent=11 // pred_check
          %p186 = pneg %p107
        $region22: #{tpu_custom_call.1} parent=11 // pred_check_branch
          %188 = sbr.rel (%p186) target = $region24
        $region23: #{tpu_custom_call.1} parent=11 // pred_region
          %190 = vsyncadd [#allocation6], 0
          %s191 = sshll.u32 %s3, 4
          %s192 = int_to_ptr.hbm [resolvable:$true] %s191
          %s193 = sshll.u32 [#allocation7], 4
          %s194 = int_to_ptr.vmem [resolvable:$true] %s193
          %199 = dma.hbm_to_vmem [thread:$0]  %s192, 3072, %s194, [#allocation6], 64, 64, 4
        $region24: #{tpu_custom_call.1} parent=11 // pred_fallthru
          _
        // Predicated region
        $region25: #{tpu_custom_call.1} parent=11 // pred_check
          %p200 = pneg %p128
        $region26: #{tpu_custom_call.1} parent=11 // pred_check_branch
          %202 = sbr.rel (%p200) target = $region28
        $region27: #{tpu_custom_call.1} parent=11 // pred_region
          _
        $region28: #{tpu_custom_call.1} parent=11 // pred_fallthru
          _
      $region12: #{tpu_custom_call.1} parent=5 // pred_fallthru
        _
      %p203 = scmp.lt.s32.totalorder %s18, 2
      // Predicated region
      $region29: #{tpu_custom_call.1} parent=5 // pred_check
        %p204 = pneg %p203
      $region30: #{tpu_custom_call.1} parent=5 // pred_check_branch
        %206 = sbr.rel (%p204) target = $region32
      $region31: #{tpu_custom_call.1} parent=5 // pred_region
        // Predicated region
        $region33: #{tpu_custom_call.1} parent=31 // pred_check
          %p207 = pneg %p38
        $region34: #{tpu_custom_call.1} parent=31 // pred_check_branch
          %209 = sbr.rel (%p207) target = $region36
        $region35: #{tpu_custom_call.1} parent=31 // pred_region
          %s210 = sand.u32 %s28, 1
          %s211 = scalar_lea.sflag [#allocation3], %s210
          %s212 = sand.u32 %s28, 1
          %s213 = smul.addr %s212, 16
          %s214 = scalar_lea.vmem [#allocation2], %s213
          %s215 = smul.u32 2, %s18
          %217 = vsyncadd %s211, 0
          %s218 = smul.addr %s215, 8
          %s219 = scalar_lea.hbm %s0, %s218
          %s220 = sshll.u32 %s219, 4
          %s221 = int_to_ptr.hbm [resolvable:$true] %s220
          %s222 = sshll.u32 %s214, 4
          %s223 = int_to_ptr.vmem [resolvable:$true] %s222
          %228 = dma.hbm_to_vmem [thread:$0]  %s221, 256, %s223, %s211, 128, 128, 8
        $region36: #{tpu_custom_call.1} parent=31 // pred_fallthru
          _
      $region32: #{tpu_custom_call.1} parent=5 // pred_fallthru
        _
      %p229 = scmp.le.s32.totalorder 1, %s18
      %p230 = scmp.lt.s32.totalorder %s18, 3
      %p231 = pnand %p229, %p230
      %p232 = pneg %p231
      // Predicated region
      $region37: #{tpu_custom_call.1} parent=5 // pred_check
        _
      $region38: #{tpu_custom_call.1} parent=5 // pred_check_branch
        %234 = sbr.rel (%p231) target = $region40
      $region39: #{tpu_custom_call.1} parent=5 // pred_region
        %s235 = ssub.s32 %s18, 1
        %s236 = sand.u32 %s31, 1
        %s237 = scalar_lea.sflag [#allocation3], %s236
        %s238 = sand.u32 %s31, 1
        %s239 = smul.addr %s238, 16
        %s240 = scalar_lea.vmem [#allocation2], %s239
        // Predicated region
        $region41: #{tpu_custom_call.1} parent=39 // pred_check
          %p241 = pneg %p44
        $region42: #{tpu_custom_call.1} parent=39 // pred_check_branch
          %243 = sbr.rel (%p241) target = $region44
        $region43: #{tpu_custom_call.1} parent=39 // pred_region
          %245 = dma.done %s237, 256
        $region44: #{tpu_custom_call.1} parent=39 // pred_fallthru
          _
        // Predicated region
        $region45: #{tpu_custom_call.1} parent=39 // pred_check
          %p246 = pneg %p65
        $region46: #{tpu_custom_call.1} parent=39 // pred_check_branch
          %248 = sbr.rel (%p246) target = $region48
        $region47: #{tpu_custom_call.1} parent=39 // pred_region
          %250 = dma.done [#allocation6], 3072
        $region48: #{tpu_custom_call.1} parent=39 // pred_fallthru
          _
        // Predicated region
        $region49: #{tpu_custom_call.1} parent=39 // pred_check
          %p251 = pneg %p107
        $region50: #{tpu_custom_call.1} parent=39 // pred_check_branch
          %253 = sbr.rel (%p251) target = $region52
        $region51: #{tpu_custom_call.1} parent=39 // pred_region
          %255 = dma.done [#allocation6], 3072
        $region52: #{tpu_custom_call.1} parent=39 // pred_fallthru
          _
        %s256 = sand.u32 %s31, 1
        %s257 = scalar_lea.sflag [#allocation3], %s256
        %s258 = sand.u32 %s31, 1
        %s259 = smul.addr %s258, 16
        %s260 = scalar_lea.vmem [#allocation2], %s259
        %p261 = pneg %p44
        %p262 = pneg %p41
        %p263 = pneg %p65
        %p264 = pneg %p62
        %p265 = pneg %p86
        %p266 = pneg %p83
        %p267 = pneg %p107
        %p268 = pneg %p104
        %p269 = pneg %p128
        %p270 = pneg %p125
        %p271 = pneg %p154
        %p272 = pneg %p151
        %s273 = sand.u32 %s141, 1
        %s274 = scalar_lea.sflag [#allocation4], %s273
        %s275 = sand.u32 %s141, 1
        %s276 = smul.addr %s275, 16
        %s277 = scalar_lea.vmem [#allocation8], %s276
        %s278 = smul.u32 2, %s23
        %s279 = smul.u32 2, %s23
        %v280 = vld [vmem:[%s240] sm:$0xff]
        %v281 = vld [vmem:[%s240 + $0x8] sm:$0xff]
        %v282 = vlaneseq
        %v283 = vshrl.u32 %v282, 7
        %v284 = vadd.s32 %v283, 8
        %vm285 = vcmp.lt.s32.totalorder %v283, 0
        %v286 = vsub.s32 0, %v283
        %v287 = vsel %vm285, %v286, %v283
        %v288 = vshrl.u32 %v287, 4
        %v289 = vand.u32 %v287, 15
        %v290 = vsub.s32 0, %v289
        %v291 = vsel %vm285, %v290, %v289
        %vm292 = vcmp.lt.s32.totalorder %v284, 0
        %v293 = vsub.s32 0, %v284
        %v294 = vsel %vm292, %v293, %v284
        %v295 = vshrl.u32 %v294, 4
        %v296 = vand.u32 %v294, 15
        %v297 = vsub.s32 0, %v296
        %v298 = vsel %vm292, %v297, %v296
        %vm299 = vcmp.ne.s32.totalorder %v291, 0
        %vm300 = vcmp.ne.s32.totalorder %v298, 0
        %vm301 = vcmp.lt.s32.totalorder %v291, 0
        %vm302 = vcmp.lt.s32.totalorder %v298, 0
        %vm303 = vmand %vm301, %vm299
        %vm304 = vmand %vm302, %vm300
        %v305 = vadd.s32 %v291, 16
        %v306 = vadd.s32 %v298, 16
        %v307 = vsel %vm303, %v305, %v291
        %v308 = vsel %vm304, %v306, %v298
        %vm309 = vcmp.ne.s32.totalorder %v307, 0
        %vm310 = vcmp.ne.s32.totalorder %v308, 0
        %v311 = vsel %vm309, 1, 0
        %v312 = vsel %vm310, 1, 0
        %v313 = vcvt.s32.f32 %v311
        %v314 = vcvt.s32.f32 %v312
        %vm315 = vcmp.ne.s32.totalorder %v307, 15
        %vm316 = vcmp.ne.s32.totalorder %v308, 15
        %v317 = vsel %vm315, 1, 0
        %v318 = vsel %vm316, 1, 0
        %v319 = vcvt.s32.f32 %v317
        %v320 = vcvt.s32.f32 %v318
        %v321 = vrot.slane %v280, 7
        %v322 = vrot.slane %v281, 7
        %vm323 = vcmp.lt.s32.totalorder %v283, 1
        %v324 = vsel %vm323, %v321, %v322
        %v325 = vsel %vm323, %v322, %v321
        %v326 = vmul.f32 %v325, %v313
        %v327 = vmul.f32 %v324, %v314
        %v328 = vpack.c.bf16 %v326, %v326
        %v329 = vpack.c.bf16 %v327, %v327
        %v330 = vpack.c.bf16 %v280, %v280
        %v331 = vpack.c.bf16 %v281, %v281
        %v332 = vrot.slane %v280, 1
        %v333 = vrot.slane %v281, 1
        %vm334 = vcmp.lt.s32.totalorder %v283, 7
        %v335 = vsel %vm334, %v332, %v333
        %v336 = vsel %vm334, %v333, %v332
        %v337 = vmul.f32 %v335, %v319
        %v338 = vmul.f32 %v336, %v320
        %v339 = vpack.c.bf16 %v337, %v337
        %v340 = vpack.c.bf16 %v338, %v338
        %v343 = vunpack.c.l.b16 %v328
        %v344 = vunpack.c.l.b16 %v329
        %v345 = vpack.c.b16 %v344, %v343
        %v349 = vunpack.c.l.b16 %v330
        %v350 = vunpack.c.l.b16 %v331
        %v351 = vpack.c.b16 %v350, %v349
        %v355 = vunpack.c.l.b16 %v339
        %v356 = vunpack.c.l.b16 %v340
        %v357 = vpack.c.b16 %v356, %v355
        %v359 = vld [vmem:[#allocation5] sm:$0xf]
        %v360 = vld [vmem:[#allocation5 + $0x4] sm:$0xf]
        %v361 = vld [vmem:[#allocation5 + $0x8] sm:$0xf]
        %v362 = vld [vmem:[#allocation5 + $0xc] sm:$0xf]
        %v363 = vld [vmem:[#allocation5 + $0x10] sm:$0xf]
        %v364 = vld [vmem:[#allocation5 + $0x14] sm:$0xf]
        %v365 = vld [vmem:[#allocation5 + $0x18] sm:$0xf]
        %v366 = vld [vmem:[#allocation5 + $0x1c] sm:$0xf]
        %v367 = vld [vmem:[#allocation5 + $0x20] sm:$0xf]
        %v368 = vld [vmem:[#allocation5 + $0x24] sm:$0xf]
        %v369 = vld [vmem:[#allocation5 + $0x28] sm:$0xf]
        %v370 = vld [vmem:[#allocation5 + $0x2c] sm:$0xf]
        %v371 = vld [vmem:[#allocation5 + $0x30] sm:$0xf]
        %v372 = vld [vmem:[#allocation5 + $0x34] sm:$0xf]
        %v373 = vld [vmem:[#allocation5 + $0x38] sm:$0xf]
        %v374 = vld [vmem:[#allocation5 + $0x3c] sm:$0xf]
        %v375 = vld [vmem:[#allocation5 + $0x40] sm:$0xf]
        %v376 = vld [vmem:[#allocation5 + $0x44] sm:$0xf]
        %v377 = vld [vmem:[#allocation5 + $0x48] sm:$0xf]
        %v378 = vld [vmem:[#allocation5 + $0x4c] sm:$0xf]
        %v379 = vld [vmem:[#allocation5 + $0x50] sm:$0xf]
        %v380 = vld [vmem:[#allocation5 + $0x54] sm:$0xf]
        %v381 = vld [vmem:[#allocation5 + $0x58] sm:$0xf]
        %v382 = vld [vmem:[#allocation5 + $0x5c] sm:$0xf]
        %v383 = vld [vmem:[#allocation5 + $0x60] sm:$0xf]
        %v384 = vld [vmem:[#allocation5 + $0x64] sm:$0xf]
        %v385 = vld [vmem:[#allocation5 + $0x68] sm:$0xf]
        %v386 = vld [vmem:[#allocation5 + $0x6c] sm:$0xf]
        %v387 = vld [vmem:[#allocation5 + $0x70] sm:$0xf]
        %v388 = vld [vmem:[#allocation5 + $0x74] sm:$0xf]
        %v389 = vld [vmem:[#allocation5 + $0x78] sm:$0xf]
        %v390 = vld [vmem:[#allocation5 + $0x7c] sm:$0xf]
        %v391 = vld [vmem:[#allocation5 + $0x80] sm:$0xf]
        %v392 = vld [vmem:[#allocation5 + $0x84] sm:$0xf]
        %v393 = vld [vmem:[#allocation5 + $0x88] sm:$0xf]
        %v394 = vld [vmem:[#allocation5 + $0x8c] sm:$0xf]
        %v395 = vld [vmem:[#allocation5 + $0x90] sm:$0xf]
        %v396 = vld [vmem:[#allocation5 + $0x94] sm:$0xf]
        %v397 = vld [vmem:[#allocation5 + $0x98] sm:$0xf]
        %v398 = vld [vmem:[#allocation5 + $0x9c] sm:$0xf]
        %v399 = vld [vmem:[#allocation5 + $0xa0] sm:$0xf]
        %v400 = vld [vmem:[#allocation5 + $0xa4] sm:$0xf]
        %v401 = vld [vmem:[#allocation5 + $0xa8] sm:$0xf]
        %v402 = vld [vmem:[#allocation5 + $0xac] sm:$0xf]
        %v403 = vld [vmem:[#allocation5 + $0xb0] sm:$0xf]
        %v404 = vld [vmem:[#allocation5 + $0xb4] sm:$0xf]
        %v405 = vld [vmem:[#allocation5 + $0xb8] sm:$0xf]
        %v406 = vld [vmem:[#allocation5 + $0xbc] sm:$0xf]
        %v407 = vld [vmem:[%s2] sm:$0x1]
        %v409 = vperm.slane %v407, 0
        %v459 = vunpack.c.l.b16 %v359
        %v460 = vunpack.c.l.b16 %v360
        %v461 = vunpack.c.l.b16 %v361
        %v462 = vunpack.c.l.b16 %v362
        %v463 = vunpack.c.l.b16 %v363
        %v464 = vunpack.c.l.b16 %v364
        %v465 = vunpack.c.l.b16 %v365
        %v466 = vunpack.c.l.b16 %v366
        %v467 = vunpack.c.l.b16 %v367
        %v468 = vunpack.c.l.b16 %v368
        %v469 = vunpack.c.l.b16 %v369
        %v470 = vunpack.c.l.b16 %v370
        %v471 = vunpack.c.l.b16 %v371
        %v472 = vunpack.c.l.b16 %v372
        %v473 = vunpack.c.l.b16 %v373
        %v474 = vunpack.c.l.b16 %v374
        %v475 = vunpack.c.l.b16 %v375
        %v476 = vunpack.c.l.b16 %v376
        %v477 = vunpack.c.l.b16 %v377
        %v478 = vunpack.c.l.b16 %v378
        %v479 = vunpack.c.l.b16 %v379
        %v480 = vunpack.c.l.b16 %v380
        %v481 = vunpack.c.l.b16 %v381
        %v482 = vunpack.c.l.b16 %v382
        %v483 = vunpack.c.l.b16 %v383
        %v484 = vunpack.c.l.b16 %v384
        %v485 = vunpack.c.l.b16 %v385
        %v486 = vunpack.c.l.b16 %v386
        %v487 = vunpack.c.l.b16 %v387
        %v488 = vunpack.c.l.b16 %v388
        %v489 = vunpack.c.l.b16 %v389
        %v490 = vunpack.c.l.b16 %v390
        %v491 = vunpack.c.l.b16 %v391
        %v492 = vunpack.c.l.b16 %v392
        %v493 = vunpack.c.l.b16 %v393
        %v494 = vunpack.c.l.b16 %v394
        %v495 = vunpack.c.l.b16 %v395
        %v496 = vunpack.c.l.b16 %v396
        %v497 = vunpack.c.l.b16 %v397
        %v498 = vunpack.c.l.b16 %v398
        %v499 = vunpack.c.l.b16 %v399
        %v500 = vunpack.c.l.b16 %v400
        %v501 = vunpack.c.l.b16 %v401
        %v502 = vunpack.c.l.b16 %v402
        %v503 = vunpack.c.l.b16 %v403
        %v504 = vunpack.c.l.b16 %v404
        %v505 = vunpack.c.l.b16 %v405
        %v506 = vunpack.c.l.b16 %v406
        %v507 = vpack.c.b16 %v460, %v459
        %v508 = vpack.c.b16 %v462, %v461
        %v509 = vpack.c.b16 %v464, %v463
        %v510 = vpack.c.b16 %v466, %v465
        %v511 = vpack.c.b16 %v468, %v467
        %v512 = vpack.c.b16 %v470, %v469
        %v513 = vpack.c.b16 %v472, %v471
        %v514 = vpack.c.b16 %v474, %v473
        %v515 = vpack.c.b16 %v476, %v475
        %v516 = vpack.c.b16 %v478, %v477
        %v517 = vpack.c.b16 %v480, %v479
        %v518 = vpack.c.b16 %v482, %v481
        %v519 = vpack.c.b16 %v484, %v483
        %v520 = vpack.c.b16 %v486, %v485
        %v521 = vpack.c.b16 %v488, %v487
        %v522 = vpack.c.b16 %v490, %v489
        %v523 = vpack.c.b16 %v492, %v491
        %v524 = vpack.c.b16 %v494, %v493
        %v525 = vpack.c.b16 %v496, %v495
        %v526 = vpack.c.b16 %v498, %v497
        %v527 = vpack.c.b16 %v500, %v499
        %v528 = vpack.c.b16 %v502, %v501
        %v529 = vpack.c.b16 %v504, %v503
        %v530 = vpack.c.b16 %v506, %v505
        %555 = vmatpush.bf16.msra.mxu0 %v514
        %556 = vmatpush.bf16.msra.mxu0 %v513
        %557 = vmatpush.bf16.msra.mxu0 %v512
        %558 = vmatpush.bf16.msra.mxu0 %v511
        %559 = vmatpush.bf16.msra.mxu0 %v510
        %560 = vmatpush.bf16.msra.mxu0 %v509
        %561 = vmatpush.bf16.msra.mxu0 %v508
        %562 = vmatpush.bf16.msra.mxu0 %v507
        %563 = vmatmul.bf16.gmra.mxu0 %v345
        %v564 = vpop.f32.mrf.mxu0
        %v565 = vadd.f32 %v409, %v564
        %v566 = vpop.f32.mrf.mxu0
        %v567 = vadd.f32 %v409, %v566
        %568 = vdwg.mxu0
        %569 = vmatpush.bf16.msra.mxu0 %v522
        %570 = vmatpush.bf16.msra.mxu0 %v521
        %571 = vmatpush.bf16.msra.mxu0 %v520
        %572 = vmatpush.bf16.msra.mxu0 %v519
        %573 = vmatpush.bf16.msra.mxu0 %v518
        %574 = vmatpush.bf16.msra.mxu0 %v517
        %575 = vmatpush.bf16.msra.mxu0 %v516
        %576 = vmatpush.bf16.msra.mxu0 %v515
        %577 = vmatmul.bf16.gmra.mxu0 %v351
        %v578 = vpop.f32.mrf.mxu0
        %v579 = vadd.f32 %v565, %v578
        %v580 = vpop.f32.mrf.mxu0
        %v581 = vadd.f32 %v567, %v580
        %582 = vdwg.mxu0
        %583 = vmatpush.bf16.msra.mxu0 %v530
        %584 = vmatpush.bf16.msra.mxu0 %v529
        %585 = vmatpush.bf16.msra.mxu0 %v528
        %586 = vmatpush.bf16.msra.mxu0 %v527
        %587 = vmatpush.bf16.msra.mxu0 %v526
        %588 = vmatpush.bf16.msra.mxu0 %v525
        %589 = vmatpush.bf16.msra.mxu0 %v524
        %590 = vmatpush.bf16.msra.mxu0 %v523
        %591 = vmatmul.bf16.gmra.mxu0 %v357
        %v592 = vpop.f32.mrf.mxu0
        %v593 = vadd.f32 %v579, %v592
        %v594 = vpop.f32.mrf.mxu0
        %v595 = vadd.f32 %v581, %v594
        %596 = vdwg.mxu0
        %v597 = vmax.f32 %v593, 0.0
        %v598 = vmax.f32 %v595, 0.0
        %v599 = vrot.slane %v597, 7
        %v600 = vrot.slane %v598, 7
        %v601 = vsel %vm323, %v599, %v600
        %v602 = vsel %vm323, %v600, %v599
        %v603 = vmul.f32 %v602, %v313
        %v604 = vmul.f32 %v601, %v314
        %v605 = vpack.c.bf16 %v603, %v603
        %v606 = vpack.c.bf16 %v604, %v604
        %v607 = vpack.c.bf16 %v597, %v597
        %v608 = vpack.c.bf16 %v598, %v598
        %v609 = vrot.slane %v597, 1
        %v610 = vrot.slane %v598, 1
        %v611 = vsel %vm334, %v609, %v610
        %v612 = vsel %vm334, %v610, %v609
        %v613 = vmul.f32 %v611, %v319
        %v614 = vmul.f32 %v612, %v320
        %v615 = vpack.c.bf16 %v613, %v613
        %v616 = vpack.c.bf16 %v614, %v614
        %v619 = vunpack.c.l.b16 %v605
        %v620 = vunpack.c.l.b16 %v606
        %v621 = vpack.c.b16 %v620, %v619
        %v625 = vunpack.c.l.b16 %v607
        %v626 = vunpack.c.l.b16 %v608
        %v627 = vpack.c.b16 %v626, %v625
        %v631 = vunpack.c.l.b16 %v615
        %v632 = vunpack.c.l.b16 %v616
        %v633 = vpack.c.b16 %v632, %v631
        %v635 = vld [vmem:[#allocation7] sm:$0xf]
        %v636 = vld [vmem:[#allocation7 + $0x4] sm:$0xf]
        %v637 = vld [vmem:[#allocation7 + $0x8] sm:$0xf]
        %v638 = vld [vmem:[#allocation7 + $0xc] sm:$0xf]
        %v639 = vld [vmem:[#allocation7 + $0x10] sm:$0xf]
        %v640 = vld [vmem:[#allocation7 + $0x14] sm:$0xf]
        %v641 = vld [vmem:[#allocation7 + $0x18] sm:$0xf]
        %v642 = vld [vmem:[#allocation7 + $0x1c] sm:$0xf]
        %v643 = vld [vmem:[#allocation7 + $0x20] sm:$0xf]
        %v644 = vld [vmem:[#allocation7 + $0x24] sm:$0xf]
        %v645 = vld [vmem:[#allocation7 + $0x28] sm:$0xf]
        %v646 = vld [vmem:[#allocation7 + $0x2c] sm:$0xf]
        %v647 = vld [vmem:[#allocation7 + $0x30] sm:$0xf]
        %v648 = vld [vmem:[#allocation7 + $0x34] sm:$0xf]
        %v649 = vld [vmem:[#allocation7 + $0x38] sm:$0xf]
        %v650 = vld [vmem:[#allocation7 + $0x3c] sm:$0xf]
        %v651 = vld [vmem:[#allocation7 + $0x40] sm:$0xf]
        %v652 = vld [vmem:[#allocation7 + $0x44] sm:$0xf]
        %v653 = vld [vmem:[#allocation7 + $0x48] sm:$0xf]
        %v654 = vld [vmem:[#allocation7 + $0x4c] sm:$0xf]
        %v655 = vld [vmem:[#allocation7 + $0x50] sm:$0xf]
        %v656 = vld [vmem:[#allocation7 + $0x54] sm:$0xf]
        %v657 = vld [vmem:[#allocation7 + $0x58] sm:$0xf]
        %v658 = vld [vmem:[#allocation7 + $0x5c] sm:$0xf]
        %v659 = vld [vmem:[#allocation7 + $0x60] sm:$0xf]
        %v660 = vld [vmem:[#allocation7 + $0x64] sm:$0xf]
        %v661 = vld [vmem:[#allocation7 + $0x68] sm:$0xf]
        %v662 = vld [vmem:[#allocation7 + $0x6c] sm:$0xf]
        %v663 = vld [vmem:[#allocation7 + $0x70] sm:$0xf]
        %v664 = vld [vmem:[#allocation7 + $0x74] sm:$0xf]
        %v665 = vld [vmem:[#allocation7 + $0x78] sm:$0xf]
        %v666 = vld [vmem:[#allocation7 + $0x7c] sm:$0xf]
        %v667 = vld [vmem:[#allocation7 + $0x80] sm:$0xf]
        %v668 = vld [vmem:[#allocation7 + $0x84] sm:$0xf]
        %v669 = vld [vmem:[#allocation7 + $0x88] sm:$0xf]
        %v670 = vld [vmem:[#allocation7 + $0x8c] sm:$0xf]
        %v671 = vld [vmem:[#allocation7 + $0x90] sm:$0xf]
        %v672 = vld [vmem:[#allocation7 + $0x94] sm:$0xf]
        %v673 = vld [vmem:[#allocation7 + $0x98] sm:$0xf]
        %v674 = vld [vmem:[#allocation7 + $0x9c] sm:$0xf]
        %v675 = vld [vmem:[#allocation7 + $0xa0] sm:$0xf]
        %v676 = vld [vmem:[#allocation7 + $0xa4] sm:$0xf]
        %v677 = vld [vmem:[#allocation7 + $0xa8] sm:$0xf]
        %v678 = vld [vmem:[#allocation7 + $0xac] sm:$0xf]
        %v679 = vld [vmem:[#allocation7 + $0xb0] sm:$0xf]
        %v680 = vld [vmem:[#allocation7 + $0xb4] sm:$0xf]
        %v681 = vld [vmem:[#allocation7 + $0xb8] sm:$0xf]
        %v682 = vld [vmem:[#allocation7 + $0xbc] sm:$0xf]
        %v683 = vld [vmem:[%s4] sm:$0x1]
        %v685 = vperm.slane %v683, 0
        %v735 = vunpack.c.l.b16 %v635
        %v736 = vunpack.c.l.b16 %v636
        %v737 = vunpack.c.l.b16 %v637
        %v738 = vunpack.c.l.b16 %v638
        %v739 = vunpack.c.l.b16 %v639
        %v740 = vunpack.c.l.b16 %v640
        %v741 = vunpack.c.l.b16 %v641
        %v742 = vunpack.c.l.b16 %v642
        %v743 = vunpack.c.l.b16 %v643
        %v744 = vunpack.c.l.b16 %v644
        %v745 = vunpack.c.l.b16 %v645
        %v746 = vunpack.c.l.b16 %v646
        %v747 = vunpack.c.l.b16 %v647
        %v748 = vunpack.c.l.b16 %v648
        %v749 = vunpack.c.l.b16 %v649
        %v750 = vunpack.c.l.b16 %v650
        %v751 = vunpack.c.l.b16 %v651
        %v752 = vunpack.c.l.b16 %v652
        %v753 = vunpack.c.l.b16 %v653
        %v754 = vunpack.c.l.b16 %v654
        %v755 = vunpack.c.l.b16 %v655
        %v756 = vunpack.c.l.b16 %v656
        %v757 = vunpack.c.l.b16 %v657
        %v758 = vunpack.c.l.b16 %v658
        %v759 = vunpack.c.l.b16 %v659
        %v760 = vunpack.c.l.b16 %v660
        %v761 = vunpack.c.l.b16 %v661
        %v762 = vunpack.c.l.b16 %v662
        %v763 = vunpack.c.l.b16 %v663
        %v764 = vunpack.c.l.b16 %v664
        %v765 = vunpack.c.l.b16 %v665
        %v766 = vunpack.c.l.b16 %v666
        %v767 = vunpack.c.l.b16 %v667
        %v768 = vunpack.c.l.b16 %v668
        %v769 = vunpack.c.l.b16 %v669
        %v770 = vunpack.c.l.b16 %v670
        %v771 = vunpack.c.l.b16 %v671
        %v772 = vunpack.c.l.b16 %v672
        %v773 = vunpack.c.l.b16 %v673
        %v774 = vunpack.c.l.b16 %v674
        %v775 = vunpack.c.l.b16 %v675
        %v776 = vunpack.c.l.b16 %v676
        %v777 = vunpack.c.l.b16 %v677
        %v778 = vunpack.c.l.b16 %v678
        %v779 = vunpack.c.l.b16 %v679
        %v780 = vunpack.c.l.b16 %v680
        %v781 = vunpack.c.l.b16 %v681
        %v782 = vunpack.c.l.b16 %v682
        %v783 = vpack.c.b16 %v736, %v735
        %v784 = vpack.c.b16 %v738, %v737
        %v785 = vpack.c.b16 %v740, %v739
        %v786 = vpack.c.b16 %v742, %v741
        %v787 = vpack.c.b16 %v744, %v743
        %v788 = vpack.c.b16 %v746, %v745
        %v789 = vpack.c.b16 %v748, %v747
        %v790 = vpack.c.b16 %v750, %v749
        %v791 = vpack.c.b16 %v752, %v751
        %v792 = vpack.c.b16 %v754, %v753
        %v793 = vpack.c.b16 %v756, %v755
        %v794 = vpack.c.b16 %v758, %v757
        %v795 = vpack.c.b16 %v760, %v759
        %v796 = vpack.c.b16 %v762, %v761
        %v797 = vpack.c.b16 %v764, %v763
        %v798 = vpack.c.b16 %v766, %v765
        %v799 = vpack.c.b16 %v768, %v767
        %v800 = vpack.c.b16 %v770, %v769
        %v801 = vpack.c.b16 %v772, %v771
        %v802 = vpack.c.b16 %v774, %v773
        %v803 = vpack.c.b16 %v776, %v775
        %v804 = vpack.c.b16 %v778, %v777
        %v805 = vpack.c.b16 %v780, %v779
        %v806 = vpack.c.b16 %v782, %v781
        %831 = vmatpush.bf16.msra.mxu0 %v790
        %832 = vmatpush.bf16.msra.mxu0 %v789
        %833 = vmatpush.bf16.msra.mxu0 %v788
        %834 = vmatpush.bf16.msra.mxu0 %v787
        %835 = vmatpush.bf16.msra.mxu0 %v786
        %836 = vmatpush.bf16.msra.mxu0 %v785
        %837 = vmatpush.bf16.msra.mxu0 %v784
        %838 = vmatpush.bf16.msra.mxu0 %v783
        %839 = vmatmul.bf16.gmra.mxu0 %v621
        %v840 = vpop.f32.mrf.mxu0
        %v841 = vadd.f32 %v685, %v840
        %v842 = vpop.f32.mrf.mxu0
        %v843 = vadd.f32 %v685, %v842
        %844 = vdwg.mxu0
        %845 = vmatpush.bf16.msra.mxu0 %v798
        %846 = vmatpush.bf16.msra.mxu0 %v797
        %847 = vmatpush.bf16.msra.mxu0 %v796
        %848 = vmatpush.bf16.msra.mxu0 %v795
        %849 = vmatpush.bf16.msra.mxu0 %v794
        %850 = vmatpush.bf16.msra.mxu0 %v793
        %851 = vmatpush.bf16.msra.mxu0 %v792
        %852 = vmatpush.bf16.msra.mxu0 %v791
        %853 = vmatmul.bf16.gmra.mxu0 %v627
        %v854 = vpop.f32.mrf.mxu0
        %v855 = vadd.f32 %v841, %v854
        %v856 = vpop.f32.mrf.mxu0
        %v857 = vadd.f32 %v843, %v856
        %858 = vdwg.mxu0
        %859 = vmatpush.bf16.msra.mxu0 %v806
        %860 = vmatpush.bf16.msra.mxu0 %v805
        %861 = vmatpush.bf16.msra.mxu0 %v804
        %862 = vmatpush.bf16.msra.mxu0 %v803
        %863 = vmatpush.bf16.msra.mxu0 %v802
        %864 = vmatpush.bf16.msra.mxu0 %v801
        %865 = vmatpush.bf16.msra.mxu0 %v800
        %866 = vmatpush.bf16.msra.mxu0 %v799
        %867 = vmatmul.bf16.gmra.mxu0 %v633
        %v868 = vpop.f32.mrf.mxu0
        %v869 = vadd.f32 %v855, %v868
        %v870 = vpop.f32.mrf.mxu0
        %v871 = vadd.f32 %v857, %v870
        %872 = vdwg.mxu0
        %v873 = vadd.f32 %v280, %v869
        %v874 = vadd.f32 %v281, %v871
        %875 = vst [vmem:[%s277] sm:$0xff] %v873
        %876 = vst [vmem:[%s277 + $0x8] sm:$0xff] %v874
        %s877 = sand.u32 %s141, 1
        %s878 = scalar_lea.sflag [#allocation4], %s877
        %s879 = sand.u32 %s141, 1
        %s880 = smul.addr %s879, 16
        %s881 = scalar_lea.vmem [#allocation8], %s880
        // Predicated region
        $region53: #{tpu_custom_call.1} parent=39 // pred_check
          %p882 = pneg %p151
        $region54: #{tpu_custom_call.1} parent=39 // pred_check_branch
          %884 = sbr.rel (%p882) target = $region56
        $region55: #{tpu_custom_call.1} parent=39 // pred_region
          %s885 = smul.u32 2, %s23
          %887 = vsyncadd %s878, 0
          %s888 = smul.addr %s885, 8
          %s889 = scalar_lea.hbm %s5, %s888
          %s890 = sshll.u32 %s881, 4
          %s891 = int_to_ptr.vmem [resolvable:$true] %s890
          %s892 = sshll.u32 %s889, 4
          %s893 = int_to_ptr.hbm [resolvable:$true] %s892
          %898 = dma.vmem_to_hbm [thread:$0]  %s891, 256, %s893, %s878, 128, 128, 8
        $region56: #{tpu_custom_call.1} parent=39 // pred_fallthru
          _
      $region40: #{tpu_custom_call.1} parent=5 // pred_fallthru
        _
      %p899 = scmp.le.s32.totalorder 2, %s18
      // Predicated region
      $region57: #{tpu_custom_call.1} parent=5 // pred_check
        %p900 = pneg %p899
      $region58: #{tpu_custom_call.1} parent=5 // pred_check_branch
        %902 = sbr.rel (%p900) target = $region60
      $region59: #{tpu_custom_call.1} parent=5 // pred_region
        %s903 = ssub.s32 %s18, 2
        // Predicated region
        $region61: #{tpu_custom_call.1} parent=59 // pred_check
          %p904 = pneg %p157
        $region62: #{tpu_custom_call.1} parent=59 // pred_check_branch
          %906 = sbr.rel (%p904) target = $region64
        $region63: #{tpu_custom_call.1} parent=59 // pred_region
          %s907 = sand.u32 %s142, 1
          %s908 = scalar_lea.sflag [#allocation4], %s907
          %s909 = sand.u32 %s142, 1
          %s910 = smul.addr %s909, 16
          %s911 = scalar_lea.vmem [#allocation8], %s910
          %913 = dma.done %s908, 256
        $region64: #{tpu_custom_call.1} parent=59 // pred_fallthru
          _
      $region60: #{tpu_custom_call.1} parent=5 // pred_fallthru
        _
    $region6: #{tpu_custom_call.1} parent=1 // loop_footer
      %s22 = sadd.s32 1, %s18
    $region7: #{tpu_custom_call.1} parent=1 // loop_footer_branch
      %17 = sbr.rel target = $region3
    $region8: #{tpu_custom_call.1} parent=1 // loop_exit
      _
    %914 = vsyncpa [#allocation3], 1
    %s915 = scalar_lea.sflag [#allocation3], 1
    %916 = vsyncpa %s915, 1
    %917 = vsyncpa [#allocation6], 1
    %918 = vsyncpa [#allocation4], 1
    %s919 = scalar_lea.sflag [#allocation4], 1
    %920 = vsyncpa %s919, 1

</llo_original>
